<compile_context>
chip_gen: v7x
topology: tpu7x:2x2x1
jax: 0.10.0
libtpu: 0.0.40
codegen_flags: <defaults>
</compile_context>

<pallas_src>
import jax
import jax.numpy as jnp
import numpy as np
from jax.experimental import pallas as pl
from jax.experimental.pallas import tpu as pltpu

KOFF = 16  # 4x4 conv kernel -> 16 flattened (ki, kj) offsets per layer


# ----------------------------------------------------------------------------
# The fused, pipelined Pallas kernel (grid axis = conv3 offset s3)
# ----------------------------------------------------------------------------
def _encoder_kernel(p1_ref, w1_ref, b1_ref, w2_ref, b2_ref, w3_ref, b3_ref,
                    w4_ref, b4_ref, wh_ref, bh_ref, o_ref, h2_ref):
    """One grid step handles one conv3 kernel offset s3.

    p1_ref : (m3, 768) patch slab for this s3; rows (s4, pixel),
             cols (s2, s1, cin) -- lane-dense.
    w1_ref : (768, 256) block-diagonal conv1 weight (block s2 = conv1 matrix).
    w2_ref : (256, 32)  conv2 weight, rows (s2, c1).
    w3_ref : (512, 16)  conv3 weight, rows (s3, c2).
    w4_ref : (256, 32)  conv4 weight, rows (s4, c3).
    wh_ref : (32, 128)  fused mu|var head, zero-padded to 128 lanes.
    o_ref  : (n4, 128)  [mu | var | pad] per final output pixel.
    h2_ref : (16*m3, 32) VMEM scratch: conv2 activations, rows (s3, s4, pixel).
    """
    s3 = pl.program_id(0)
    m3 = p1_ref.shape[0]            # 16 * n4
    n4 = o_ref.shape[0]

    # ---- conv1 (+ReLU): all 16 s2 offsets in ONE K=768 dot (block-diag W1) --
    h1 = jnp.dot(p1_ref[...], w1_ref[...], preferred_element_type=jnp.float32)
    h1 = jnp.maximum(h1 + b1_ref[...], 0.0)                     # (m3, 256)

    # ---- conv2 (+ReLU): ONE K=256 dot ---------------------------------------
    h2 = jnp.dot(h1, w2_ref[...], preferred_element_type=jnp.float32)
    h2 = jnp.maximum(h2 + b2_ref[...], 0.0)                     # (m3, 32)

    row0 = pl.multiple_of(s3 * m3, 8)
    h2_ref[pl.ds(row0, m3), :] = h2                             # stored once

    # ---- epilogue on the last grid step: conv3, conv4, fused heads ----------
    @pl.when(s3 == pl.num_programs(0) - 1)
    def _():
        # relayout s3: rows -> K lanes (16 static 8-aligned slices + concat)
        lhs3 = jnp.concatenate(
            [h2_ref[i * m3:(i + 1) * m3, :] for i in range(KOFF)], axis=1)
        h3 = jnp.dot(lhs3, w3_ref[...], preferred_element_type=jnp.float32)
        h3 = jnp.maximum(h3 + b3_ref[...], 0.0)                 # (m3, 16)

        # relayout s4: rows -> K lanes
        lhs4 = jnp.concatenate(
            [h3[i * n4:(i + 1) * n4, :] for i in range(KOFF)], axis=1)
        h4 = jnp.dot(lhs4, w4_ref[...], preferred_element_type=jnp.float32)
        h4 = jnp.maximum(h4 + b4_ref[...], 0.0)                 # (n4, 32)

        # fused mu|var heads, lane-dense (128-wide) output store
        o_ref[...] = jnp.dot(h4, wh_ref[...],
                             preferred_element_type=jnp.float32) + bh_ref[...]


# ----------------------------------------------------------------------------
# Wrapper-side patch-pyramid construction (static slices / stack / transpose)
# ----------------------------------------------------------------------------
def _axis_im2col(a, axis, out_len, k=4, stride=2):
    """Insert a new size-k axis at `axis`; the original axis (now at axis+1)
    shrinks to out_len, with original_index = new_k + stride * reduced_index."""
    parts = []
    for off in range(k):
        idx = [slice(None)] * a.ndim
        idx[axis] = slice(off, off + stride * (out_len - 1) + 1, stride)
        parts.append(a[tuple(idx)])
    return jnp.stack(parts, axis=axis)


def _build_patch_pyramid(x_nhwc):
    """Build P1 of shape (256*n4, 256*C): rows (s3, s4, b, y4, x4),
    cols (s2, s1, c) where s_L = ki_L*4 + kj_L.  Lane-dense (256*3 = 768)."""
    n, H, W, C = x_nhwc.shape
    dims = []
    h, w = H, W
    for _ in range(4):
        h = (h - 4) // 2 + 1
        w = (w - 4) // 2 + 1
        dims.append((h, w))
    (h1, w1), (h2, w2), (h3, w3), (h4, w4) = dims

    u = x_nhwc                          # (b, Y, X, c)
    u = _axis_im2col(u, 1, h1)          # (b, ki1, y1, X, c)
    u = _axis_im2col(u, 2, h2)          # (b, ki1, ki2, y2, X, c)
    u = _axis_im2col(u, 3, h3)          # (b, ki1, ki2, ki3, y3, X, c)
    u = _axis_im2col(u, 4, h4)          # (b, ki1..ki4, y4, X, c)
    u = _axis_im2col(u, 6, w1)
    u = _axis_im2col(u, 7, w2)
    u = _axis_im2col(u, 8, w3)
    u = _axis_im2col(u, 9, w4)
    # axes: (b, ki1, ki2, ki3, ki4, y4, kj1, kj2, kj3, kj4, x4, c)
    #        0   1    2    3    4   5    6    7    8    9   10  11
    # rows (ki3,kj3, ki4,kj4, b, y4, x4)  /  cols (ki2,kj2, ki1,kj1, c)
    u = jnp.transpose(u, (3, 8, 4, 9, 0, 5, 10, 2, 7, 1, 6, 11))
    n4 = n * h4 * w4
    p1 = u.reshape(16 * 16 * n4, 16 * 16 * C)
    return p1, (h4, w4), n4


# ----------------------------------------------------------------------------
# One-time parameter preparation (all weight-layout transforms hoisted here)
# ----------------------------------------------------------------------------
def prepare_params(params):
    def flat(w):                        # OIHW -> (kh*kw*cin, cout)
        co, ci, kh, kw = w.shape
        return jnp.transpose(w, (2, 3, 1, 0)).reshape(kh * kw * ci, co)

    (w1, b1), (w2, b2), (w3, b3), (w4, b4) = params["enc"]
    w1f = flat(w1)                                          # (48, 16)
    w1bd = jnp.kron(jnp.eye(KOFF, dtype=w1f.dtype), w1f)    # (768, 256)
    b1t = jnp.tile(b1, KOFF).reshape(1, -1)                 # (1, 256)

    w_mu, b_mu = params["mu"]
    w_var, b_var = params["var"]
    wmu = w_mu[:, :, 0, 0].T                                # (32, 32)
    wvar = w_var[:, :, 0, 0].T
    wh = jnp.concatenate([wmu, wvar], axis=1)               # (32, 64)
    bh = jnp.concatenate([b_mu, b_var]).reshape(1, -1)      # (1, 64)
    lane_pad = (-wh.shape[1]) % 128                         # pad head to 128 lanes
    whp = jnp.pad(wh, ((0, 0), (0, lane_pad)))
    bhp = jnp.pad(bh, ((0, 0), (0, lane_pad)))

    return {"w1bd": w1bd, "b1": b1t,
            "w2": flat(w2), "b2": b2.reshape(1, -1),
            "w3": flat(w3), "b3": b3.reshape(1, -1),
            "w4": flat(w4), "b4": b4.reshape(1, -1),
            "wh": whp, "bh": bhp}


# ----------------------------------------------------------------------------
# Encoder forward (NCHW in / NCHW out, matching the PyTorch module)
# ----------------------------------------------------------------------------
def encoder_forward(x_nchw, prepared):
    zc = 32                              # head channels fixed at 32 in the module
    x = jnp.transpose(x_nchw, (0, 2, 3, 1))                  # NCHW -> NHWC
    p1, (h4, w4), n4 = _build_patch_pyramid(x)
    m3 = KOFF * n4
    ncol = p1.shape[1]                                        # 768
    whp, bhp = prepared["wh"], prepared["bh"]

    out = pl.pallas_call(
        _encoder_kernel,
        out_shape=jax.ShapeDtypeStruct((n4, whp.shape[1]), jnp.float32),
        grid_spec=pltpu.PrefetchScalarGridSpec(
            num_scalar_prefetch=0,
            grid=(KOFF,),                                     # stream over s3
            in_specs=[
                pl.BlockSpec((m3, ncol), lambda s: (s, 0)),   # P1: 96 KiB / step
                pl.BlockSpec(prepared["w1bd"].shape, lambda s: (0, 0)),  # resident
                pl.BlockSpec(prepared["b1"].shape, lambda s: (0, 0)),
                pl.BlockSpec(prepared["w2"].shape, lambda s: (0, 0)),
                pl.BlockSpec(prepared["b2"].shape, lambda s: (0, 0)),
                pl.BlockSpec(prepared["w3"].shape, lambda s: (0, 0)),
                pl.BlockSpec(prepared["b3"].shape, lambda s: (0, 0)),
                pl.BlockSpec(prepared["w4"].shape, lambda s: (0, 0)),
                pl.BlockSpec(prepared["b4"].shape, lambda s: (0, 0)),
                pl.BlockSpec(whp.shape, lambda s: (0, 0)),
                pl.BlockSpec(bhp.shape, lambda s: (0, 0)),
            ],
            out_specs=pl.BlockSpec((n4, whp.shape[1]), lambda s: (0, 0)),
            scratch_shapes=[pltpu.VMEM((KOFF * m3, prepared["w2"].shape[1]),
                                       jnp.float32)],
        ),
        compiler_params=pltpu.CompilerParams(
            dimension_semantics=("arbitrary",),
            vmem_limit_bytes=32 * 1024 * 1024),
    )(p1, prepared["w1bd"], prepared["b1"], prepared["w2"], prepared["b2"],
      prepared["w3"], prepared["b3"], prepared["w4"], prepared["b4"],
      whp, bhp)

    n = x_nchw.shape[0]
    mu = out[:, :zc].reshape(n, h4, w4, zc).transpose(0, 3, 1, 2)
    var = out[:, zc:2 * zc].reshape(n, h4, w4, zc).transpose(0, 3, 1, 2)
    return mu, var


# ----------------------------------------------------------------------------
# Deterministic parameter init (shapes from the PyTorch __init__)
# ----------------------------------------------------------------------------
def init_params(key):
    layer_defs = [(16, 3), (32, 16), (16, 32), (32, 16)]     # (cout, cin), k=4
    keys = jax.random.split(key, len(layer_defs) * 2 + 4)
    enc = []
    ki = 0
    for cout, cin in layer_defs:
        fan_in = cin * 4 * 4
        w = jax.random.normal(keys[ki], (cout, cin, 4, 4), jnp.float32) / np.sqrt(fan_in)
        b = 0.01 * jax.random.normal(keys[ki + 1], (cout,), jnp.float32)
        enc.append((w, b))
        ki += 2
    w_mu = jax.random.normal(keys[ki], (32, 32, 1, 1), jnp.float32) / np.sqrt(32)
    b_mu = 0.01 * jax.random.normal(keys[ki + 1], (32,), jnp.float32)
    w_var = jax.random.normal(keys[ki + 2], (32, 32, 1, 1), jnp.float32) / np.sqrt(32)
    b_var = 0.01 * jax.random.normal(keys[ki + 3], (32,), jnp.float32)
    return {"enc": enc, "mu": (w_mu, b_mu), "var": (w_var, b_var)}


# ----------------------------------------------------------------------------
# Pure-JAX reference (lax.conv) for correctness check
# ----------------------------------------------------------------------------
def reference_forward(x_nchw, params):
    def conv(x, w, b, stride, relu):
        o = jax.lax.conv_general_dilated(
            x, w, (stride, stride), "VALID",
            dimension_numbers=("NCHW", "OIHW", "NCHW"))
        o = o + b.reshape(1, -1, 1, 1)
        return jnp.maximum(o, 0.0) if relu else o

    h = x_nchw
    for (w, b) in params["enc"]:
        h = conv(h, w, b, 2, True)
    mu = conv(h, params["mu"][0], params["mu"][1], 1, False)
    var = conv(h, params["var"][0], params["var"][1], 1, False)
    return mu, var


if __name__ == "__main__":
    key = jax.random.PRNGKey(0)
    k_param, k_x = jax.random.split(key)
    params = init_params(k_param)
    prepared = prepare_params(params)

    # batch=2, 3 input channels, 48x48 spatial -> final 1x1 spatial, 32 ch.
    x = jax.random.normal(k_x, (2, 3, 48, 48), jnp.float32)

    fwd = jax.jit(encoder_forward)
    z_mu, z_var = fwd(x, prepared)
    z_mu = jax.block_until_ready(z_mu)
    z_var = jax.block_until_ready(z_var)

    ref_mu, ref_var = reference_forward(x, params)
    np.testing.assert_allclose(np.asarray(z_mu), np.asarray(ref_mu),
                               rtol=2e-4, atol=1e-4)
    np.testing.assert_allclose(np.asarray(z_var), np.asarray(ref_var),
                               rtol=2e-4, atol=1e-4)

    assert z_mu.shape == (2, 32, 1, 1) and z_var.shape == (2, 32, 1, 1)
    print("KERNEL_OK")
</pallas_src>

<mosaic_0001>
module attributes {stable_mosaic.version = 11 : i64} {
  func.func @_encoder_kernel(%arg0: i32, %arg1: memref<32x768xf32, #tpu.memory_space<vmem>>, %arg2: memref<768x256xf32, #tpu.memory_space<vmem>>, %arg3: memref<1x256xf32, #tpu.memory_space<vmem>>, %arg4: memref<256x32xf32, #tpu.memory_space<vmem>>, %arg5: memref<1x32xf32, #tpu.memory_space<vmem>>, %arg6: memref<512x16xf32, #tpu.memory_space<vmem>>, %arg7: memref<1x16xf32, #tpu.memory_space<vmem>>, %arg8: memref<256x32xf32, #tpu.memory_space<vmem>>, %arg9: memref<1x32xf32, #tpu.memory_space<vmem>>, %arg10: memref<32x128xf32, #tpu.memory_space<vmem>>, %arg11: memref<1x128xf32, #tpu.memory_space<vmem>>, %arg12: memref<2x128xf32, #tpu.memory_space<vmem>>, %arg13: memref<512x32xf32, #tpu.memory_space<vmem>>) attributes {dimension_semantics = [#tpu.dimension_semantics<arbitrary>], iteration_bounds = array<i64: 16>, scalar_prefetch = 0 : i64, scratch_operands = 1 : i64, tpu.core_type = #tpu.core_type<tc>, window_params = [{transform_indices = @transform_0, window_bounds = array<i64: 32, 768>}, {pipeline_mode = #tpu.pipeline_mode<synchronous>, transform_indices = @transform_1, window_bounds = array<i64: 768, 256>}, {pipeline_mode = #tpu.pipeline_mode<synchronous>, transform_indices = @transform_2, window_bounds = array<i64: 1, 256>}, {pipeline_mode = #tpu.pipeline_mode<synchronous>, transform_indices = @transform_3, window_bounds = array<i64: 256, 32>}, {pipeline_mode = #tpu.pipeline_mode<synchronous>, transform_indices = @transform_4, window_bounds = array<i64: 1, 32>}, {pipeline_mode = #tpu.pipeline_mode<synchronous>, transform_indices = @transform_5, window_bounds = array<i64: 512, 16>}, {pipeline_mode = #tpu.pipeline_mode<synchronous>, transform_indices = @transform_6, window_bounds = array<i64: 1, 16>}, {pipeline_mode = #tpu.pipeline_mode<synchronous>, transform_indices = @transform_7, window_bounds = array<i64: 256, 32>}, {pipeline_mode = #tpu.pipeline_mode<synchronous>, transform_indices = @transform_8, window_bounds = array<i64: 1, 32>}, {pipeline_mode = #tpu.pipeline_mode<synchronous>, transform_indices = @transform_9, window_bounds = array<i64: 32, 128>}, {pipeline_mode = #tpu.pipeline_mode<synchronous>, transform_indices = @transform_10, window_bounds = array<i64: 1, 128>}, {pipeline_mode = #tpu.pipeline_mode<synchronous>, transform_indices = @transform_11, window_bounds = array<i64: 2, 128>}]} {
    %c0 = arith.constant 0 : index
    %c0_0 = arith.constant 0 : index
    %0 = vector.load %arg1[%c0, %c0_0] : memref<32x768xf32, #tpu.memory_space<vmem>>, vector<32x768xf32>
    %c0_1 = arith.constant 0 : index
    %c0_2 = arith.constant 0 : index
    %1 = vector.load %arg2[%c0_1, %c0_2] : memref<768x256xf32, #tpu.memory_space<vmem>>, vector<768x256xf32>
    %cst = arith.constant dense<0.000000e+00> : vector<32x256xf32>
    %2 = tpu.matmul %0, %1, %cst {dimension_numbers = #tpu.dot_dimension_numbers<[1], [0], [0], [1], [0, 0, 1, 1], [], []>} : vector<32x768xf32>, vector<768x256xf32>, vector<32x256xf32> -> vector<32x256xf32>
    %c0_3 = arith.constant 0 : index
    %c0_4 = arith.constant 0 : index
    %3 = vector.load %arg3[%c0_3, %c0_4] : memref<1x256xf32, #tpu.memory_space<vmem>>, vector<1x256xf32>
    %4 = vector.broadcast %3 : vector<1x256xf32> to vector<32x256xf32>
    %5 = arith.addf %2, %4 : vector<32x256xf32>
    %cst_5 = arith.constant 0.000000e+00 : f32
    %6 = vector.broadcast %cst_5 : f32 to vector<32x256xf32>
    %7 = arith.maximumf %5, %6 : vector<32x256xf32>
    %c0_6 = arith.constant 0 : index
    %c0_7 = arith.constant 0 : index
    %8 = vector.load %arg4[%c0_6, %c0_7] : memref<256x32xf32, #tpu.memory_space<vmem>>, vector<256x32xf32>
    %cst_8 = arith.constant dense<0.000000e+00> : vector<32x32xf32>
    %9 = tpu.matmul %7, %8, %cst_8 {dimension_numbers = #tpu.dot_dimension_numbers<[1], [0], [0], [1], [0, 0, 1, 1], [], []>} : vector<32x256xf32>, vector<256x32xf32>, vector<32x32xf32> -> vector<32x32xf32>
    %c0_9 = arith.constant 0 : index
    %c0_10 = arith.constant 0 : index
    %10 = vector.load %arg5[%c0_9, %c0_10] : memref<1x32xf32, #tpu.memory_space<vmem>>, vector<1x32xf32>
    %11 = vector.broadcast %10 : vector<1x32xf32> to vector<32x32xf32>
    %12 = arith.addf %9, %11 : vector<32x32xf32>
    %cst_11 = arith.constant 0.000000e+00 : f32
    %13 = vector.broadcast %cst_11 : f32 to vector<32x32xf32>
    %14 = arith.maximumf %12, %13 : vector<32x32xf32>
    %c32_i32 = arith.constant 32 : i32
    %15 = arith.muli %arg0, %c32_i32 : i32
    %16 = tpu.assume_multiple %15, 8 : i32
    %17 = arith.index_cast %16 : i32 to index
    %c0_12 = arith.constant 0 : index
    %18 = vector.load %arg13[%17, %c0_12] : memref<512x32xf32, #tpu.memory_space<vmem>>, vector<32x32xf32>
    tpu.vector_store %arg13[%17, %c0_12], %14 {strides = array<i32>} : memref<512x32xf32, #tpu.memory_space<vmem>>, vector<32x32xf32>,
    %c15_i32 = arith.constant 15 : i32
    %19 = arith.cmpi eq, %arg0, %c15_i32 : i32
    %20 = arith.extui %19 : i1 to i32
    %c0_i32 = arith.constant 0 : i32
    %21 = arith.cmpi ne, %20, %c0_i32 : i32
    scf.if %21 {
      %c0_13 = arith.constant 0 : index
      %c0_14 = arith.constant 0 : index
      %22 = vector.load %arg13[%c0_13, %c0_14] : memref<512x32xf32, #tpu.memory_space<vmem>>, vector<32x32xf32>
      %c32 = arith.constant 32 : index
      %c0_15 = arith.constant 0 : index
      %23 = vector.load %arg13[%c32, %c0_15] : memref<512x32xf32, #tpu.memory_space<vmem>>, vector<32x32xf32>
      %c64 = arith.constant 64 : index
      %c0_16 = arith.constant 0 : index
      %24 = vector.load %arg13[%c64, %c0_16] : memref<512x32xf32, #tpu.memory_space<vmem>>, vector<32x32xf32>
      %c96 = arith.constant 96 : index
      %c0_17 = arith.constant 0 : index
      %25 = vector.load %arg13[%c96, %c0_17] : memref<512x32xf32, #tpu.memory_space<vmem>>, vector<32x32xf32>
      %c128 = arith.constant 128 : index
      %c0_18 = arith.constant 0 : index
      %26 = vector.load %arg13[%c128, %c0_18] : memref<512x32xf32, #tpu.memory_space<vmem>>, vector<32x32xf32>
      %c160 = arith.constant 160 : index
      %c0_19 = arith.constant 0 : index
      %27 = vector.load %arg13[%c160, %c0_19] : memref<512x32xf32, #tpu.memory_space<vmem>>, vector<32x32xf32>
      %c192 = arith.constant 192 : index
      %c0_20 = arith.constant 0 : index
      %28 = vector.load %arg13[%c192, %c0_20] : memref<512x32xf32, #tpu.memory_space<vmem>>, vector<32x32xf32>
      %c224 = arith.constant 224 : index
      %c0_21 = arith.constant 0 : index
      %29 = vector.load %arg13[%c224, %c0_21] : memref<512x32xf32, #tpu.memory_space<vmem>>, vector<32x32xf32>
      %c256 = arith.constant 256 : index
      %c0_22 = arith.constant 0 : index
      %30 = vector.load %arg13[%c256, %c0_22] : memref<512x32xf32, #tpu.memory_space<vmem>>, vector<32x32xf32>
      %c288 = arith.constant 288 : index
      %c0_23 = arith.constant 0 : index
      %31 = vector.load %arg13[%c288, %c0_23] : memref<512x32xf32, #tpu.memory_space<vmem>>, vector<32x32xf32>
      %c320 = arith.constant 320 : index
      %c0_24 = arith.constant 0 : index
      %32 = vector.load %arg13[%c320, %c0_24] : memref<512x32xf32, #tpu.memory_space<vmem>>, vector<32x32xf32>
      %c352 = arith.constant 352 : index
      %c0_25 = arith.constant 0 : index
      %33 = vector.load %arg13[%c352, %c0_25] : memref<512x32xf32, #tpu.memory_space<vmem>>, vector<32x32xf32>
      %c384 = arith.constant 384 : index
      %c0_26 = arith.constant 0 : index
      %34 = vector.load %arg13[%c384, %c0_26] : memref<512x32xf32, #tpu.memory_space<vmem>>, vector<32x32xf32>
      %c416 = arith.constant 416 : index
      %c0_27 = arith.constant 0 : index
      %35 = vector.load %arg13[%c416, %c0_27] : memref<512x32xf32, #tpu.memory_space<vmem>>, vector<32x32xf32>
      %c448 = arith.constant 448 : index
      %c0_28 = arith.constant 0 : index
      %36 = vector.load %arg13[%c448, %c0_28] : memref<512x32xf32, #tpu.memory_space<vmem>>, vector<32x32xf32>
      %c480 = arith.constant 480 : index
      %c0_29 = arith.constant 0 : index
      %37 = vector.load %arg13[%c480, %c0_29] : memref<512x32xf32, #tpu.memory_space<vmem>>, vector<32x32xf32>
      %38 = tpu.concatenate %22, %23, %24, %25, %26, %27, %28, %29, %30, %31, %32, %33, %34, %35, %36, %37 in 1 : vector<32x32xf32>, vector<32x32xf32>, vector<32x32xf32>, vector<32x32xf32>, vector<32x32xf32>, vector<32x32xf32>, vector<32x32xf32>, vector<32x32xf32>, vector<32x32xf32>, vector<32x32xf32>, vector<32x32xf32>, vector<32x32xf32>, vector<32x32xf32>, vector<32x32xf32>, vector<32x32xf32>, vector<32x32xf32> -> vector<32x512xf32>
      %c0_30 = arith.constant 0 : index
      %c0_31 = arith.constant 0 : index
      %39 = vector.load %arg6[%c0_30, %c0_31] : memref<512x16xf32, #tpu.memory_space<vmem>>, vector<512x16xf32>
      %cst_32 = arith.constant dense<0.000000e+00> : vector<32x16xf32>
      %40 = tpu.matmul %38, %39, %cst_32 {dimension_numbers = #tpu.dot_dimension_numbers<[1], [0], [0], [1], [0, 0, 1, 1], [], []>} : vector<32x512xf32>, vector<512x16xf32>, vector<32x16xf32> -> vector<32x16xf32>
      %c0_33 = arith.constant 0 : index
      %c0_34 = arith.constant 0 : index
      %41 = vector.load %arg7[%c0_33, %c0_34] : memref<1x16xf32, #tpu.memory_space<vmem>>, vector<1x16xf32>
      %42 = vector.broadcast %41 : vector<1x16xf32> to vector<32x16xf32>
      %43 = arith.addf %40, %42 : vector<32x16xf32>
      %cst_35 = arith.constant 0.000000e+00 : f32
      %44 = vector.broadcast %cst_35 : f32 to vector<32x16xf32>
      %45 = arith.maximumf %43, %44 : vector<32x16xf32>
      %46 = vector.extract_strided_slice %45 {offsets = [0, 0], sizes = [2, 16], strides = [1, 1]} : vector<32x16xf32> to vector<2x16xf32>
      %47 = vector.extract_strided_slice %45 {offsets = [2, 0], sizes = [2, 16], strides = [1, 1]} : vector<32x16xf32> to vector<2x16xf32>
      %48 = vector.extract_strided_slice %45 {offsets = [4, 0], sizes = [2, 16], strides = [1, 1]} : vector<32x16xf32> to vector<2x16xf32>
      %49 = vector.extract_strided_slice %45 {offsets = [6, 0], sizes = [2, 16], strides = [1, 1]} : vector<32x16xf32> to vector<2x16xf32>
      %50 = vector.extract_strided_slice %45 {offsets = [8, 0], sizes = [2, 16], strides = [1, 1]} : vector<32x16xf32> to vector<2x16xf32>
      %51 = vector.extract_strided_slice %45 {offsets = [10, 0], sizes = [2, 16], strides = [1, 1]} : vector<32x16xf32> to vector<2x16xf32>
      %52 = vector.extract_strided_slice %45 {offsets = [12, 0], sizes = [2, 16], strides = [1, 1]} : vector<32x16xf32> to vector<2x16xf32>
      %53 = vector.extract_strided_slice %45 {offsets = [14, 0], sizes = [2, 16], strides = [1, 1]} : vector<32x16xf32> to vector<2x16xf32>
      %54 = vector.extract_strided_slice %45 {offsets = [16, 0], sizes = [2, 16], strides = [1, 1]} : vector<32x16xf32> to vector<2x16xf32>
      %55 = vector.extract_strided_slice %45 {offsets = [18, 0], sizes = [2, 16], strides = [1, 1]} : vector<32x16xf32> to vector<2x16xf32>
      %56 = vector.extract_strided_slice %45 {offsets = [20, 0], sizes = [2, 16], strides = [1, 1]} : vector<32x16xf32> to vector<2x16xf32>
      %57 = vector.extract_strided_slice %45 {offsets = [22, 0], sizes = [2, 16], strides = [1, 1]} : vector<32x16xf32> to vector<2x16xf32>
      %58 = vector.extract_strided_slice %45 {offsets = [24, 0], sizes = [2, 16], strides = [1, 1]} : vector<32x16xf32> to vector<2x16xf32>
      %59 = vector.extract_strided_slice %45 {offsets = [26, 0], sizes = [2, 16], strides = [1, 1]} : vector<32x16xf32> to vector<2x16xf32>
      %60 = vector.extract_strided_slice %45 {offsets = [28, 0], sizes = [2, 16], strides = [1, 1]} : vector<32x16xf32> to vector<2x16xf32>
      %61 = vector.extract_strided_slice %45 {offsets = [30, 0], sizes = [2, 16], strides = [1, 1]} : vector<32x16xf32> to vector<2x16xf32>
      %62 = tpu.concatenate %46, %47, %48, %49, %50, %51, %52, %53, %54, %55, %56, %57, %58, %59, %60, %61 in 1 : vector<2x16xf32>, vector<2x16xf32>, vector<2x16xf32>, vector<2x16xf32>, vector<2x16xf32>, vector<2x16xf32>, vector<2x16xf32>, vector<2x16xf32>, vector<2x16xf32>, vector<2x16xf32>, vector<2x16xf32>, vector<2x16xf32>, vector<2x16xf32>, vector<2x16xf32>, vector<2x16xf32>, vector<2x16xf32> -> vector<2x256xf32>
      %c0_36 = arith.constant 0 : index
      %c0_37 = arith.constant 0 : index
      %63 = vector.load %arg8[%c0_36, %c0_37] : memref<256x32xf32, #tpu.memory_space<vmem>>, vector<256x32xf32>
      %cst_38 = arith.constant dense<0.000000e+00> : vector<2x32xf32>
      %64 = tpu.matmul %62, %63, %cst_38 {dimension_numbers = #tpu.dot_dimension_numbers<[1], [0], [0], [1], [0, 0, 1, 1], [], []>} : vector<2x256xf32>, vector<256x32xf32>, vector<2x32xf32> -> vector<2x32xf32>
      %c0_39 = arith.constant 0 : index
      %c0_40 = arith.constant 0 : index
      %65 = vector.load %arg9[%c0_39, %c0_40] : memref<1x32xf32, #tpu.memory_space<vmem>>, vector<1x32xf32>
      %66 = vector.broadcast %65 : vector<1x32xf32> to vector<2x32xf32>
      %67 = arith.addf %64, %66 : vector<2x32xf32>
      %cst_41 = arith.constant 0.000000e+00 : f32
      %68 = vector.broadcast %cst_41 : f32 to vector<2x32xf32>
      %69 = arith.maximumf %67, %68 : vector<2x32xf32>
      %c0_42 = arith.constant 0 : index
      %c0_43 = arith.constant 0 : index
      %70 = vector.load %arg10[%c0_42, %c0_43] : memref<32x128xf32, #tpu.memory_space<vmem>>, vector<32x128xf32>
      %cst_44 = arith.constant dense<0.000000e+00> : vector<2x128xf32>
      %71 = tpu.matmul %69, %70, %cst_44 {dimension_numbers = #tpu.dot_dimension_numbers<[1], [0], [0], [1], [0, 0, 1, 1], [], []>} : vector<2x32xf32>, vector<32x128xf32>, vector<2x128xf32> -> vector<2x128xf32>
      %c0_45 = arith.constant 0 : index
      %c0_46 = arith.constant 0 : index
      %72 = vector.load %arg11[%c0_45, %c0_46] : memref<1x128xf32, #tpu.memory_space<vmem>>, vector<1x128xf32>
      %73 = vector.broadcast %72 : vector<1x128xf32> to vector<2x128xf32>
      %74 = arith.addf %71, %73 : vector<2x128xf32>
      %c0_47 = arith.constant 0 : index
      %c0_48 = arith.constant 0 : index
      %75 = vector.load %arg12[%c0_47, %c0_48] : memref<2x128xf32, #tpu.memory_space<vmem>>, vector<2x128xf32>
      tpu.vector_store %arg12[%c0_47, %c0_48], %74 {strides = array<i32>} : memref<2x128xf32, #tpu.memory_space<vmem>>, vector<2x128xf32>,
    } else {
    }
    return
  }
  func.func @transform_0(%arg0: i32) -> (i32, i32) {
    %c0_i32 = arith.constant 0 : i32
    %c0_i32_0 = arith.constant 0 : i32
    return %arg0, %c0_i32 : i32, i32
  }
  func.func @transform_1(%arg0: i32) -> (i32, i32) {
    %c0_i32 = arith.constant 0 : i32
    %c0_i32_0 = arith.constant 0 : i32
    %c0_i32_1 = arith.constant 0 : i32
    return %c0_i32, %c0_i32_0 : i32, i32
  }
  func.func @transform_2(%arg0: i32) -> (i32, i32) {
    %c0_i32 = arith.constant 0 : i32
    %c0_i32_0 = arith.constant 0 : i32
    %c0_i32_1 = arith.constant 0 : i32
    return %c0_i32, %c0_i32_0 : i32, i32
  }
  func.func @transform_3(%arg0: i32) -> (i32, i32) {
    %c0_i32 = arith.constant 0 : i32
    %c0_i32_0 = arith.constant 0 : i32
    %c0_i32_1 = arith.constant 0 : i32
    return %c0_i32, %c0_i32_0 : i32, i32
  }
  func.func @transform_4(%arg0: i32) -> (i32, i32) {
    %c0_i32 = arith.constant 0 : i32
    %c0_i32_0 = arith.constant 0 : i32
    %c0_i32_1 = arith.constant 0 : i32
    return %c0_i32, %c0_i32_0 : i32, i32
  }
  func.func @transform_5(%arg0: i32) -> (i32, i32) {
    %c0_i32 = arith.constant 0 : i32
    %c0_i32_0 = arith.constant 0 : i32
    %c0_i32_1 = arith.constant 0 : i32
    return %c0_i32, %c0_i32_0 : i32, i32
  }
  func.func @transform_6(%arg0: i32) -> (i32, i32) {
    %c0_i32 = arith.constant 0 : i32
    %c0_i32_0 = arith.constant 0 : i32
    %c0_i32_1 = arith.constant 0 : i32
    return %c0_i32, %c0_i32_0 : i32, i32
  }
  func.func @transform_7(%arg0: i32) -> (i32, i32) {
    %c0_i32 = arith.constant 0 : i32
    %c0_i32_0 = arith.constant 0 : i32
    %c0_i32_1 = arith.constant 0 : i32
    return %c0_i32, %c0_i32_0 : i32, i32
  }
  func.func @transform_8(%arg0: i32) -> (i32, i32) {
    %c0_i32 = arith.constant 0 : i32
    %c0_i32_0 = arith.constant 0 : i32
    %c0_i32_1 = arith.constant 0 : i32
    return %c0_i32, %c0_i32_0 : i32, i32
  }
  func.func @transform_9(%arg0: i32) -> (i32, i32) {
    %c0_i32 = arith.constant 0 : i32
    %c0_i32_0 = arith.constant 0 : i32
    %c0_i32_1 = arith.constant 0 : i32
    return %c0_i32, %c0_i32_0 : i32, i32
  }
  func.func @transform_10(%arg0: i32) -> (i32, i32) {
    %c0_i32 = arith.constant 0 : i32
    %c0_i32_0 = arith.constant 0 : i32
    %c0_i32_1 = arith.constant 0 : i32
    return %c0_i32, %c0_i32_0 : i32, i32
  }
  func.func @transform_11(%arg0: i32) -> (i32, i32) {
    %c0_i32 = arith.constant 0 : i32
    %c0_i32_0 = arith.constant 0 : i32
    %c0_i32_1 = arith.constant 0 : i32
    return %c0_i32, %c0_i32_0 : i32, i32
  }
}

</mosaic_0001>

<llo_original>
// kernel: encoder_forward.1
$region0: #{encoder_forward.1}
  #allocation0 [shape = 'u32[]', space=smem, size = 0x4, offset = 0x4, fixed_abs, tag = 'smem constant byte address 0x4 - core index']
  #allocation1 [shape = 'u32[144,128]{1,0:T(1,128)}', space=vmem, size = 0x12000, scoped, tag = 'internal scratch']
  #allocation2 [shape = 'f32[512,32]{1,0:T(8,128)}', space=vmem, size = 0x40000, scoped, tag = 'scratch operand']
  %s0 = inlined_call_operand.vmem [shape: f32[512,768], index: 0, kind: input, shape index: {}]
  %s1 = inlined_call_operand.vmem [shape: f32[768,256], index: 1, kind: input, shape index: {}]
  %s2 = inlined_call_operand.vmem [shape: f32[1,256], index: 2, kind: input, shape index: {}]
  %s3 = inlined_call_operand.vmem [shape: f32[256,32], index: 3, kind: input, shape index: {}]
  %s4 = inlined_call_operand.vmem [shape: f32[1,32], index: 4, kind: input, shape index: {}]
  %s5 = inlined_call_operand.vmem [shape: f32[512,16], index: 5, kind: input, shape index: {}]
  %s6 = inlined_call_operand.vmem [shape: f32[1,16], index: 6, kind: input, shape index: {}]
  %s7 = inlined_call_operand.vmem [shape: f32[256,32], index: 7, kind: input, shape index: {}]
  %s8 = inlined_call_operand.vmem [shape: f32[1,32], index: 8, kind: input, shape index: {}]
  %s9 = inlined_call_operand.vmem [shape: f32[32,128], index: 9, kind: input, shape index: {}]
  %s10 = inlined_call_operand.vmem [shape: f32[1,128], index: 10, kind: input, shape index: {}]
  %s11 = inlined_call_operand.vmem [shape: f32[2,128], index: 11, kind: output, shape index: {}]
  %s12 = sld [smem:[#allocation0]]
  $region81: #{encoder_forward.1} parent=0
    _
  %s14 = ssub.s32 1, %s12
  %s15 = scalar_select 0, %s14, %s12
  loop: start=0, step=1, limit=18
  $region2: #{encoder_forward.1} parent=0 // loop_pre_header
    _
  $region3: #{encoder_forward.1} parent=0 // loop_header
    %s17 = sphi 0, %s21
    %p18 = scmp.ge.s32.totalorder %s17, 18
    %s27 = sphi 0, %s29
    %s30 = sphi 0, %s27
    %s31 = sphi 0, %s30
    %s47 = sphi 0, %s31
    %s51 = sphi 0, %s51
    %s53 = sphi 0, %s51
    %s54 = sphi 0, %s53
    %s68 = sphi 0, %s54
    %s72 = sphi 0, %s72
    %s74 = sphi 0, %s72
    %s75 = sphi 0, %s74
    %s89 = sphi 0, %s75
    %s93 = sphi 0, %s93
    %s95 = sphi 0, %s93
    %s96 = sphi 0, %s95
    %s110 = sphi 0, %s96
    %s114 = sphi 0, %s114
    %s116 = sphi 0, %s114
    %s117 = sphi 0, %s116
    %s131 = sphi 0, %s117
    %s135 = sphi 0, %s135
    %s137 = sphi 0, %s135
    %s138 = sphi 0, %s137
    %s152 = sphi 0, %s138
    %s156 = sphi 0, %s156
    %s158 = sphi 0, %s156
    %s159 = sphi 0, %s158
    %s173 = sphi 0, %s159
    %s177 = sphi 0, %s177
    %s179 = sphi 0, %s177
    %s180 = sphi 0, %s179
    %s194 = sphi 0, %s180
    %s198 = sphi 0, %s198
    %s200 = sphi 0, %s198
    %s201 = sphi 0, %s200
    %s215 = sphi 0, %s201
    %s219 = sphi 0, %s219
    %s221 = sphi 0, %s219
    %s222 = sphi 0, %s221
    %s236 = sphi 0, %s222
    %s240 = sphi 0, %s240
    %s242 = sphi 0, %s240
    %s243 = sphi 0, %s242
    %s257 = sphi 0, %s243
    %s261 = sphi 0, %s261
    %s263 = sphi 0, %s261
    %s264 = sphi 0, %s263
    %s278 = sphi 0, %s264
  $region4: #{encoder_forward.1} parent=0 // loop_header_branch
    %20 = sbr.rel (%p18) target = $region8
  $region5: #{encoder_forward.1} parent=0 // loop_body
    %s22 = ssub.s32 %s17, 1
    %s23 = ssub.s32 %s17, 2
    %s24 = sadd.s32 %s17, 1
    %s25 = ssub.s32 %s17, %s24
    %p26 = scmp.eq.s32.totalorder %s25, 0
    %s28 = sadd.s32 %s27, 1
    %s29 = scalar_select %p26, %s27, %s28
    %p32 = pneg %p26
    %p33 = scmp.eq.s32.totalorder %s17, 15
    %p34 = por %p32, %p33
    %p35 = scmp.ne.s32.totalorder %s27, %s30
    %p36 = scmp.eq.s32.totalorder %s17, 0
    %p37 = por %p35, %p36
    %p38 = scmp.ne.s32.totalorder %s27, %s30
    %p39 = scmp.eq.s32.totalorder %s22, 15
    %p40 = por %p38, %p39
    %p41 = scmp.ne.s32.totalorder %s30, %s31
    %p42 = scmp.eq.s32.totalorder %s22, 0
    %p43 = por %p41, %p42
    %p44 = scmp.ne.s32.totalorder %s30, %s31
    %p45 = scmp.eq.s32.totalorder %s23, 15
    %p46 = por %p44, %p45
    %p48 = scmp.ne.s32.totalorder %s31, %s47
    %p49 = scmp.eq.s32.totalorder %s23, 0
    %p50 = por %p48, %p49
    %s52 = sadd.s32 %s51, 1
    %p55 = scmp.eq.s32.totalorder %s17, 15
    %p56 = scmp.ne.s32.totalorder %s51, %s53
    %p57 = scmp.eq.s32.totalorder %s17, 0
    %p58 = por %p56, %p57
    %p59 = scmp.ne.s32.totalorder %s51, %s53
    %p60 = scmp.eq.s32.totalorder %s22, 15
    %p61 = por %p59, %p60
    %p62 = scmp.ne.s32.totalorder %s53, %s54
    %p63 = scmp.eq.s32.totalorder %s22, 0
    %p64 = por %p62, %p63
    %p65 = scmp.ne.s32.totalorder %s53, %s54
    %p66 = scmp.eq.s32.totalorder %s23, 15
    %p67 = por %p65, %p66
    %p69 = scmp.ne.s32.totalorder %s54, %s68
    %p70 = scmp.eq.s32.totalorder %s23, 0
    %p71 = por %p69, %p70
    %s73 = sadd.s32 %s72, 1
    %p76 = scmp.eq.s32.totalorder %s17, 15
    %p77 = scmp.ne.s32.totalorder %s72, %s74
    %p78 = scmp.eq.s32.totalorder %s17, 0
    %p79 = por %p77, %p78
    %p80 = scmp.ne.s32.totalorder %s72, %s74
    %p81 = scmp.eq.s32.totalorder %s22, 15
    %p82 = por %p80, %p81
    %p83 = scmp.ne.s32.totalorder %s74, %s75
    %p84 = scmp.eq.s32.totalorder %s22, 0
    %p85 = por %p83, %p84
    %p86 = scmp.ne.s32.totalorder %s74, %s75
    %p87 = scmp.eq.s32.totalorder %s23, 15
    %p88 = por %p86, %p87
    %p90 = scmp.ne.s32.totalorder %s75, %s89
    %p91 = scmp.eq.s32.totalorder %s23, 0
    %p92 = por %p90, %p91
    %s94 = sadd.s32 %s93, 1
    %p97 = scmp.eq.s32.totalorder %s17, 15
    %p98 = scmp.ne.s32.totalorder %s93, %s95
    %p99 = scmp.eq.s32.totalorder %s17, 0
    %p100 = por %p98, %p99
    %p101 = scmp.ne.s32.totalorder %s93, %s95
    %p102 = scmp.eq.s32.totalorder %s22, 15
    %p103 = por %p101, %p102
    %p104 = scmp.ne.s32.totalorder %s95, %s96
    %p105 = scmp.eq.s32.totalorder %s22, 0
    %p106 = por %p104, %p105
    %p107 = scmp.ne.s32.totalorder %s95, %s96
    %p108 = scmp.eq.s32.totalorder %s23, 15
    %p109 = por %p107, %p108
    %p111 = scmp.ne.s32.totalorder %s96, %s110
    %p112 = scmp.eq.s32.totalorder %s23, 0
    %p113 = por %p111, %p112
    %s115 = sadd.s32 %s114, 1
    %p118 = scmp.eq.s32.totalorder %s17, 15
    %p119 = scmp.ne.s32.totalorder %s114, %s116
    %p120 = scmp.eq.s32.totalorder %s17, 0
    %p121 = por %p119, %p120
    %p122 = scmp.ne.s32.totalorder %s114, %s116
    %p123 = scmp.eq.s32.totalorder %s22, 15
    %p124 = por %p122, %p123
    %p125 = scmp.ne.s32.totalorder %s116, %s117
    %p126 = scmp.eq.s32.totalorder %s22, 0
    %p127 = por %p125, %p126
    %p128 = scmp.ne.s32.totalorder %s116, %s117
    %p129 = scmp.eq.s32.totalorder %s23, 15
    %p130 = por %p128, %p129
    %p132 = scmp.ne.s32.totalorder %s117, %s131
    %p133 = scmp.eq.s32.totalorder %s23, 0
    %p134 = por %p132, %p133
    %s136 = sadd.s32 %s135, 1
    %p139 = scmp.eq.s32.totalorder %s17, 15
    %p140 = scmp.ne.s32.totalorder %s135, %s137
    %p141 = scmp.eq.s32.totalorder %s17, 0
    %p142 = por %p140, %p141
    %p143 = scmp.ne.s32.totalorder %s135, %s137
    %p144 = scmp.eq.s32.totalorder %s22, 15
    %p145 = por %p143, %p144
    %p146 = scmp.ne.s32.totalorder %s137, %s138
    %p147 = scmp.eq.s32.totalorder %s22, 0
    %p148 = por %p146, %p147
    %p149 = scmp.ne.s32.totalorder %s137, %s138
    %p150 = scmp.eq.s32.totalorder %s23, 15
    %p151 = por %p149, %p150
    %p153 = scmp.ne.s32.totalorder %s138, %s152
    %p154 = scmp.eq.s32.totalorder %s23, 0
    %p155 = por %p153, %p154
    %s157 = sadd.s32 %s156, 1
    %p160 = scmp.eq.s32.totalorder %s17, 15
    %p161 = scmp.ne.s32.totalorder %s156, %s158
    %p162 = scmp.eq.s32.totalorder %s17, 0
    %p163 = por %p161, %p162
    %p164 = scmp.ne.s32.totalorder %s156, %s158
    %p165 = scmp.eq.s32.totalorder %s22, 15
    %p166 = por %p164, %p165
    %p167 = scmp.ne.s32.totalorder %s158, %s159
    %p168 = scmp.eq.s32.totalorder %s22, 0
    %p169 = por %p167, %p168
    %p170 = scmp.ne.s32.totalorder %s158, %s159
    %p171 = scmp.eq.s32.totalorder %s23, 15
    %p172 = por %p170, %p171
    %p174 = scmp.ne.s32.totalorder %s159, %s173
    %p175 = scmp.eq.s32.totalorder %s23, 0
    %p176 = por %p174, %p175
    %s178 = sadd.s32 %s177, 1
    %p181 = scmp.eq.s32.totalorder %s17, 15
    %p182 = scmp.ne.s32.totalorder %s177, %s179
    %p183 = scmp.eq.s32.totalorder %s17, 0
    %p184 = por %p182, %p183
    %p185 = scmp.ne.s32.totalorder %s177, %s179
    %p186 = scmp.eq.s32.totalorder %s22, 15
    %p187 = por %p185, %p186
    %p188 = scmp.ne.s32.totalorder %s179, %s180
    %p189 = scmp.eq.s32.totalorder %s22, 0
    %p190 = por %p188, %p189
    %p191 = scmp.ne.s32.totalorder %s179, %s180
    %p192 = scmp.eq.s32.totalorder %s23, 15
    %p193 = por %p191, %p192
    %p195 = scmp.ne.s32.totalorder %s180, %s194
    %p196 = scmp.eq.s32.totalorder %s23, 0
    %p197 = por %p195, %p196
    %s199 = sadd.s32 %s198, 1
    %p202 = scmp.eq.s32.totalorder %s17, 15
    %p203 = scmp.ne.s32.totalorder %s198, %s200
    %p204 = scmp.eq.s32.totalorder %s17, 0
    %p205 = por %p203, %p204
    %p206 = scmp.ne.s32.totalorder %s198, %s200
    %p207 = scmp.eq.s32.totalorder %s22, 15
    %p208 = por %p206, %p207
    %p209 = scmp.ne.s32.totalorder %s200, %s201
    %p210 = scmp.eq.s32.totalorder %s22, 0
    %p211 = por %p209, %p210
    %p212 = scmp.ne.s32.totalorder %s200, %s201
    %p213 = scmp.eq.s32.totalorder %s23, 15
    %p214 = por %p212, %p213
    %p216 = scmp.ne.s32.totalorder %s201, %s215
    %p217 = scmp.eq.s32.totalorder %s23, 0
    %p218 = por %p216, %p217
    %s220 = sadd.s32 %s219, 1
    %p223 = scmp.eq.s32.totalorder %s17, 15
    %p224 = scmp.ne.s32.totalorder %s219, %s221
    %p225 = scmp.eq.s32.totalorder %s17, 0
    %p226 = por %p224, %p225
    %p227 = scmp.ne.s32.totalorder %s219, %s221
    %p228 = scmp.eq.s32.totalorder %s22, 15
    %p229 = por %p227, %p228
    %p230 = scmp.ne.s32.totalorder %s221, %s222
    %p231 = scmp.eq.s32.totalorder %s22, 0
    %p232 = por %p230, %p231
    %p233 = scmp.ne.s32.totalorder %s221, %s222
    %p234 = scmp.eq.s32.totalorder %s23, 15
    %p235 = por %p233, %p234
    %p237 = scmp.ne.s32.totalorder %s222, %s236
    %p238 = scmp.eq.s32.totalorder %s23, 0
    %p239 = por %p237, %p238
    %s241 = sadd.s32 %s240, 1
    %p244 = scmp.eq.s32.totalorder %s17, 15
    %p245 = scmp.ne.s32.totalorder %s240, %s242
    %p246 = scmp.eq.s32.totalorder %s17, 0
    %p247 = por %p245, %p246
    %p248 = scmp.ne.s32.totalorder %s240, %s242
    %p249 = scmp.eq.s32.totalorder %s22, 15
    %p250 = por %p248, %p249
    %p251 = scmp.ne.s32.totalorder %s242, %s243
    %p252 = scmp.eq.s32.totalorder %s22, 0
    %p253 = por %p251, %p252
    %p254 = scmp.ne.s32.totalorder %s242, %s243
    %p255 = scmp.eq.s32.totalorder %s23, 15
    %p256 = por %p254, %p255
    %p258 = scmp.ne.s32.totalorder %s243, %s257
    %p259 = scmp.eq.s32.totalorder %s23, 0
    %p260 = por %p258, %p259
    %s262 = sadd.s32 %s261, 1
    %p265 = scmp.eq.s32.totalorder %s17, 15
    %p266 = scmp.ne.s32.totalorder %s261, %s263
    %p267 = scmp.eq.s32.totalorder %s17, 0
    %p268 = por %p266, %p267
    %p269 = scmp.ne.s32.totalorder %s261, %s263
    %p270 = scmp.eq.s32.totalorder %s22, 15
    %p271 = por %p269, %p270
    %p272 = scmp.ne.s32.totalorder %s263, %s264
    %p273 = scmp.eq.s32.totalorder %s22, 0
    %p274 = por %p272, %p273
    %p275 = scmp.ne.s32.totalorder %s263, %s264
    %p276 = scmp.eq.s32.totalorder %s23, 15
    %p277 = por %p275, %p276
    %p279 = scmp.ne.s32.totalorder %s264, %s278
    %p280 = scmp.eq.s32.totalorder %s23, 0
    %p281 = por %p279, %p280
    %p282 = scmp.le.s32.totalorder 1, %s17
    %p283 = scmp.lt.s32.totalorder %s17, 17
    %p284 = pnand %p282, %p283
    %p285 = pneg %p284
    // Predicated region
    $region9: #{encoder_forward.1} parent=5 // pred_check
      _
    $region10: #{encoder_forward.1} parent=5 // pred_check_branch
      %287 = sbr.rel (%p284) target = $region12
    $region11: #{encoder_forward.1} parent=5 // pred_region
      %s288 = ssub.s32 %s17, 1
      // Predicated region
      $region13: #{encoder_forward.1} parent=11 // pred_check
        %p289 = pneg %p64
      $region14: #{encoder_forward.1} parent=11 // pred_check_branch
        %291 = sbr.rel (%p289) target = $region16
      $region15: #{encoder_forward.1} parent=11 // pred_region
        _
      $region16: #{encoder_forward.1} parent=11 // pred_fallthru
        _
      // Predicated region
      $region17: #{encoder_forward.1} parent=11 // pred_check
        %p292 = pneg %p85
      $region18: #{encoder_forward.1} parent=11 // pred_check_branch
        %294 = sbr.rel (%p292) target = $region20
      $region19: #{encoder_forward.1} parent=11 // pred_region
        _
      $region20: #{encoder_forward.1} parent=11 // pred_fallthru
        _
      // Predicated region
      $region21: #{encoder_forward.1} parent=11 // pred_check
        %p295 = pneg %p106
      $region22: #{encoder_forward.1} parent=11 // pred_check_branch
        %297 = sbr.rel (%p295) target = $region24
      $region23: #{encoder_forward.1} parent=11 // pred_region
        _
      $region24: #{encoder_forward.1} parent=11 // pred_fallthru
        _
      // Predicated region
      $region25: #{encoder_forward.1} parent=11 // pred_check
        %p298 = pneg %p127
      $region26: #{encoder_forward.1} parent=11 // pred_check_branch
        %300 = sbr.rel (%p298) target = $region28
      $region27: #{encoder_forward.1} parent=11 // pred_region
        _
      $region28: #{encoder_forward.1} parent=11 // pred_fallthru
        _
      // Predicated region
      $region29: #{encoder_forward.1} parent=11 // pred_check
        %p301 = pneg %p148
      $region30: #{encoder_forward.1} parent=11 // pred_check_branch
        %303 = sbr.rel (%p301) target = $region32
      $region31: #{encoder_forward.1} parent=11 // pred_region
        _
      $region32: #{encoder_forward.1} parent=11 // pred_fallthru
        _
      // Predicated region
      $region33: #{encoder_forward.1} parent=11 // pred_check
        %p304 = pneg %p169
      $region34: #{encoder_forward.1} parent=11 // pred_check_branch
        %306 = sbr.rel (%p304) target = $region36
      $region35: #{encoder_forward.1} parent=11 // pred_region
        _
      $region36: #{encoder_forward.1} parent=11 // pred_fallthru
        _
      // Predicated region
      $region37: #{encoder_forward.1} parent=11 // pred_check
        %p307 = pneg %p190
      $region38: #{encoder_forward.1} parent=11 // pred_check_branch
        %309 = sbr.rel (%p307) target = $region40
      $region39: #{encoder_forward.1} parent=11 // pred_region
        _
      $region40: #{encoder_forward.1} parent=11 // pred_fallthru
        _
      // Predicated region
      $region41: #{encoder_forward.1} parent=11 // pred_check
        %p310 = pneg %p211
      $region42: #{encoder_forward.1} parent=11 // pred_check_branch
        %312 = sbr.rel (%p310) target = $region44
      $region43: #{encoder_forward.1} parent=11 // pred_region
        _
      $region44: #{encoder_forward.1} parent=11 // pred_fallthru
        _
      // Predicated region
      $region45: #{encoder_forward.1} parent=11 // pred_check
        %p313 = pneg %p232
      $region46: #{encoder_forward.1} parent=11 // pred_check_branch
        %315 = sbr.rel (%p313) target = $region48
      $region47: #{encoder_forward.1} parent=11 // pred_region
        _
      $region48: #{encoder_forward.1} parent=11 // pred_fallthru
        _
      // Predicated region
      $region49: #{encoder_forward.1} parent=11 // pred_check
        %p316 = pneg %p253
      $region50: #{encoder_forward.1} parent=11 // pred_check_branch
        %318 = sbr.rel (%p316) target = $region52
      $region51: #{encoder_forward.1} parent=11 // pred_region
        _
      $region52: #{encoder_forward.1} parent=11 // pred_fallthru
        _
    $region12: #{encoder_forward.1} parent=5 // pred_fallthru
      _
    %p319 = scmp.lt.s32.totalorder %s17, 16
    // Predicated region
    $region53: #{encoder_forward.1} parent=5 // pred_check
      %p320 = pneg %p319
    $region54: #{encoder_forward.1} parent=5 // pred_check_branch
      %322 = sbr.rel (%p320) target = $region56
    $region55: #{encoder_forward.1} parent=5 // pred_region
      // Predicated region
      $region57: #{encoder_forward.1} parent=55 // pred_check
        %p323 = pneg %p37
      $region58: #{encoder_forward.1} parent=55 // pred_check_branch
        %325 = sbr.rel (%p323) target = $region60
      $region59: #{encoder_forward.1} parent=55 // pred_region
        %s326 = smul.u32 4, %s17
        %p327 = scmp.lt.s32.totalorder %s326, 63
        %s328 = scalar_select %p327, %s326, 63
        %s329 = smul.addr %s328, 6
        %s330 = smul.addr %s329, 8
        %s331 = scalar_lea.vmem %s0, %s330
        %s332 = smul.u32 4, %s17
      $region60: #{encoder_forward.1} parent=55 // pred_fallthru
        _
    $region56: #{encoder_forward.1} parent=5 // pred_fallthru
      _
    %p333 = scmp.le.s32.totalorder 1, %s17
    %p334 = scmp.lt.s32.totalorder %s17, 17
    %p335 = pnand %p333, %p334
    %p336 = pneg %p335
    // Predicated region
    $region61: #{encoder_forward.1} parent=5 // pred_check
      _
    $region62: #{encoder_forward.1} parent=5 // pred_check_branch
      %338 = sbr.rel (%p335) target = $region64
    $region63: #{encoder_forward.1} parent=5 // pred_region
      %s339 = ssub.s32 %s17, 1
      %s340 = smul.u32 4, %s22
      %p341 = scmp.lt.s32.totalorder %s340, 63
      %s342 = scalar_select %p341, %s340, 63
      %s343 = smul.addr %s342, 6
      %s344 = smul.addr %s343, 8
      %s345 = scalar_lea.vmem %s0, %s344
      %p346 = pneg %p43
      %p347 = pneg %p40
      %p348 = pneg %p64
      %p349 = pneg %p61
      %p350 = pneg %p85
      %p351 = pneg %p82
      %p352 = pneg %p106
      %p353 = pneg %p103
      %p354 = pneg %p127
      %p355 = pneg %p124
      %p356 = pneg %p148
      %p357 = pneg %p145
      %p358 = pneg %p169
      %p359 = pneg %p166
      %p360 = pneg %p190
      %p361 = pneg %p187
      %p362 = pneg %p211
      %p363 = pneg %p208
      %p364 = pneg %p232
      %p365 = pneg %p229
      %p366 = pneg %p253
      %p367 = pneg %p250
      %p368 = pneg %p274
      %p369 = pneg %p271
      %s370 = smul.u32 4, %s22
      %p371 = scmp.lt.s32.totalorder %s370, 63
      %s372 = scalar_select %p371, %s370, 63
      %s373 = smul.addr %s372, 6
      %s374 = smul.addr %s373, 8
      %s375 = scalar_lea.vmem %s0, %s374
      %s376 = smul.u32 4, %s22
      %v377 = vld [vmem:[%s375] sm:$0xff]
      %v378 = vld [vmem:[%s375 + $0x8] sm:$0xff]
      %v379 = vld [vmem:[%s375 + $0x10] sm:$0xff]
      %v380 = vld [vmem:[%s375 + $0x18] sm:$0xff]
      %v381 = vld [vmem:[%s375 + $0x20] sm:$0xff]
      %v382 = vld [vmem:[%s375 + $0x28] sm:$0xff]
      %v383 = vld [vmem:[%s375 + $0x30] sm:$0xff]
      %v384 = vld [vmem:[%s375 + $0x38] sm:$0xff]
      %v385 = vld [vmem:[%s375 + $0x40] sm:$0xff]
      %v386 = vld [vmem:[%s375 + $0x48] sm:$0xff]
      %v387 = vld [vmem:[%s375 + $0x50] sm:$0xff]
      %v388 = vld [vmem:[%s375 + $0x58] sm:$0xff]
      %v389 = vld [vmem:[%s375 + $0x60] sm:$0xff]
      %v390 = vld [vmem:[%s375 + $0x68] sm:$0xff]
      %v391 = vld [vmem:[%s375 + $0x70] sm:$0xff]
      %v392 = vld [vmem:[%s375 + $0x78] sm:$0xff]
      %v393 = vld [vmem:[%s375 + $0x80] sm:$0xff]
      %v394 = vld [vmem:[%s375 + $0x88] sm:$0xff]
      %v395 = vld [vmem:[%s375 + $0x90] sm:$0xff]
      %v396 = vld [vmem:[%s375 + $0x98] sm:$0xff]
      %v397 = vld [vmem:[%s375 + $0xa0] sm:$0xff]
      %v398 = vld [vmem:[%s375 + $0xa8] sm:$0xff]
      %v399 = vld [vmem:[%s375 + $0xb0] sm:$0xff]
      %v400 = vld [vmem:[%s375 + $0xb8] sm:$0xff]
      %v401 = vld [vmem:[%s1] sm:$0xff]
      %v402 = vld [vmem:[%s1 + $0x8] sm:$0xff]
      %v403 = vld [vmem:[%s1 + $0x10] sm:$0xff]
      %v404 = vld [vmem:[%s1 + $0x18] sm:$0xff]
      %v405 = vld [vmem:[%s1 + $0x20] sm:$0xff]
      %v406 = vld [vmem:[%s1 + $0x28] sm:$0xff]
      %v407 = vld [vmem:[%s1 + $0x30] sm:$0xff]
      %v408 = vld [vmem:[%s1 + $0x38] sm:$0xff]
      %v409 = vld [vmem:[%s1 + $0x40] sm:$0xff]
      %v410 = vld [vmem:[%s1 + $0x48] sm:$0xff]
      %v411 = vld [vmem:[%s1 + $0x50] sm:$0xff]
      %v412 = vld [vmem:[%s1 + $0x58] sm:$0xff]
      %v413 = vld [vmem:[%s1 + $0x60] sm:$0xff]
      %v414 = vld [vmem:[%s1 + $0x68] sm:$0xff]
      %v415 = vld [vmem:[%s1 + $0x70] sm:$0xff]
      %v416 = vld [vmem:[%s1 + $0x78] sm:$0xff]
      %v417 = vld [vmem:[%s1 + $0x80] sm:$0xff]
      %v418 = vld [vmem:[%s1 + $0x88] sm:$0xff]
      %v419 = vld [vmem:[%s1 + $0x90] sm:$0xff]
      %v420 = vld [vmem:[%s1 + $0x98] sm:$0xff]
      %v421 = vld [vmem:[%s1 + $0xa0] sm:$0xff]
      %v422 = vld [vmem:[%s1 + $0xa8] sm:$0xff]
      %v423 = vld [vmem:[%s1 + $0xb0] sm:$0xff]
      %v424 = vld [vmem:[%s1 + $0xb8] sm:$0xff]
      %v425 = vld [vmem:[%s1 + $0xc0] sm:$0xff]
      %v426 = vld [vmem:[%s1 + $0xc8] sm:$0xff]
      %v427 = vld [vmem:[%s1 + $0xd0] sm:$0xff]
      %v428 = vld [vmem:[%s1 + $0xd8] sm:$0xff]
      %v429 = vld [vmem:[%s1 + $0xe0] sm:$0xff]
      %v430 = vld [vmem:[%s1 + $0xe8] sm:$0xff]
      %v431 = vld [vmem:[%s1 + $0xf0] sm:$0xff]
      %v432 = vld [vmem:[%s1 + $0xf8] sm:$0xff]
      %v433 = vld [vmem:[%s1 + $0x100] sm:$0xff]
      %v434 = vld [vmem:[%s1 + $0x108] sm:$0xff]
      %v435 = vld [vmem:[%s1 + $0x110] sm:$0xff]
      %v436 = vld [vmem:[%s1 + $0x118] sm:$0xff]
      %v437 = vld [vmem:[%s1 + $0x120] sm:$0xff]
      %v438 = vld [vmem:[%s1 + $0x128] sm:$0xff]
      %v439 = vld [vmem:[%s1 + $0x130] sm:$0xff]
      %v440 = vld [vmem:[%s1 + $0x138] sm:$0xff]
      %v441 = vld [vmem:[%s1 + $0x140] sm:$0xff]
      %v442 = vld [vmem:[%s1 + $0x148] sm:$0xff]
      %v443 = vld [vmem:[%s1 + $0x150] sm:$0xff]
      %v444 = vld [vmem:[%s1 + $0x158] sm:$0xff]
      %v445 = vld [vmem:[%s1 + $0x160] sm:$0xff]
      %v446 = vld [vmem:[%s1 + $0x168] sm:$0xff]
      %v447 = vld [vmem:[%s1 + $0x170] sm:$0xff]
      %v448 = vld [vmem:[%s1 + $0x178] sm:$0xff]
      %v449 = vld [vmem:[%s1 + $0x180] sm:$0xff]
      %v450 = vld [vmem:[%s1 + $0x188] sm:$0xff]
      %v451 = vld [vmem:[%s1 + $0x190] sm:$0xff]
      %v452 = vld [vmem:[%s1 + $0x198] sm:$0xff]
      %v453 = vld [vmem:[%s1 + $0x1a0] sm:$0xff]
      %v454 = vld [vmem:[%s1 + $0x1a8] sm:$0xff]
      %v455 = vld [vmem:[%s1 + $0x1b0] sm:$0xff]
      %v456 = vld [vmem:[%s1 + $0x1b8] sm:$0xff]
      %v457 = vld [vmem:[%s1 + $0x1c0] sm:$0xff]
      %v458 = vld [vmem:[%s1 + $0x1c8] sm:$0xff]
      %v459 = vld [vmem:[%s1 + $0x1d0] sm:$0xff]
      %v460 = vld [vmem:[%s1 + $0x1d8] sm:$0xff]
      %v461 = vld [vmem:[%s1 + $0x1e0] sm:$0xff]
      %v462 = vld [vmem:[%s1 + $0x1e8] sm:$0xff]
      %v463 = vld [vmem:[%s1 + $0x1f0] sm:$0xff]
      %v464 = vld [vmem:[%s1 + $0x1f8] sm:$0xff]
      %v465 = vld [vmem:[%s1 + $0x200] sm:$0xff]
      %v466 = vld [vmem:[%s1 + $0x208] sm:$0xff]
      %v467 = vld [vmem:[%s1 + $0x210] sm:$0xff]
      %v468 = vld [vmem:[%s1 + $0x218] sm:$0xff]
      %v469 = vld [vmem:[%s1 + $0x220] sm:$0xff]
      %v470 = vld [vmem:[%s1 + $0x228] sm:$0xff]
      %v471 = vld [vmem:[%s1 + $0x230] sm:$0xff]
      %v472 = vld [vmem:[%s1 + $0x238] sm:$0xff]
      %v473 = vld [vmem:[%s1 + $0x240] sm:$0xff]
      %v474 = vld [vmem:[%s1 + $0x248] sm:$0xff]
      %v475 = vld [vmem:[%s1 + $0x250] sm:$0xff]
      %v476 = vld [vmem:[%s1 + $0x258] sm:$0xff]
      %v477 = vld [vmem:[%s1 + $0x260] sm:$0xff]
      %v478 = vld [vmem:[%s1 + $0x268] sm:$0xff]
      %v479 = vld [vmem:[%s1 + $0x270] sm:$0xff]
      %v480 = vld [vmem:[%s1 + $0x278] sm:$0xff]
      %v481 = vld [vmem:[%s1 + $0x280] sm:$0xff]
      %v482 = vld [vmem:[%s1 + $0x288] sm:$0xff]
      %v483 = vld [vmem:[%s1 + $0x290] sm:$0xff]
      %v484 = vld [vmem:[%s1 + $0x298] sm:$0xff]
      %v485 = vld [vmem:[%s1 + $0x2a0] sm:$0xff]
      %v486 = vld [vmem:[%s1 + $0x2a8] sm:$0xff]
      %v487 = vld [vmem:[%s1 + $0x2b0] sm:$0xff]
      %v488 = vld [vmem:[%s1 + $0x2b8] sm:$0xff]
      %v489 = vld [vmem:[%s1 + $0x2c0] sm:$0xff]
      %v490 = vld [vmem:[%s1 + $0x2c8] sm:$0xff]
      %v491 = vld [vmem:[%s1 + $0x2d0] sm:$0xff]
      %v492 = vld [vmem:[%s1 + $0x2d8] sm:$0xff]
      %v493 = vld [vmem:[%s1 + $0x2e0] sm:$0xff]
      %v494 = vld [vmem:[%s1 + $0x2e8] sm:$0xff]
      %v495 = vld [vmem:[%s1 + $0x2f0] sm:$0xff]
      %v496 = vld [vmem:[%s1 + $0x2f8] sm:$0xff]
      %v497 = vld [vmem:[%s1 + $0x300] sm:$0xff]
      %v498 = vld [vmem:[%s1 + $0x308] sm:$0xff]
      %v499 = vld [vmem:[%s1 + $0x310] sm:$0xff]
      %v500 = vld [vmem:[%s1 + $0x318] sm:$0xff]
      %v501 = vld [vmem:[%s1 + $0x320] sm:$0xff]
      %v502 = vld [vmem:[%s1 + $0x328] sm:$0xff]
      %v503 = vld [vmem:[%s1 + $0x330] sm:$0xff]
      %v504 = vld [vmem:[%s1 + $0x338] sm:$0xff]
      %v505 = vld [vmem:[%s1 + $0x340] sm:$0xff]
      %v506 = vld [vmem:[%s1 + $0x348] sm:$0xff]
      %v507 = vld [vmem:[%s1 + $0x350] sm:$0xff]
      %v508 = vld [vmem:[%s1 + $0x358] sm:$0xff]
      %v509 = vld [vmem:[%s1 + $0x360] sm:$0xff]
      %v510 = vld [vmem:[%s1 + $0x368] sm:$0xff]
      %v511 = vld [vmem:[%s1 + $0x370] sm:$0xff]
      %v512 = vld [vmem:[%s1 + $0x378] sm:$0xff]
      %v513 = vld [vmem:[%s1 + $0x380] sm:$0xff]
      %v514 = vld [vmem:[%s1 + $0x388] sm:$0xff]
      %v515 = vld [vmem:[%s1 + $0x390] sm:$0xff]
      %v516 = vld [vmem:[%s1 + $0x398] sm:$0xff]
      %v517 = vld [vmem:[%s1 + $0x3a0] sm:$0xff]
      %v518 = vld [vmem:[%s1 + $0x3a8] sm:$0xff]
      %v519 = vld [vmem:[%s1 + $0x3b0] sm:$0xff]
      %v520 = vld [vmem:[%s1 + $0x3b8] sm:$0xff]
      %v521 = vld [vmem:[%s1 + $0x3c0] sm:$0xff]
      %v522 = vld [vmem:[%s1 + $0x3c8] sm:$0xff]
      %v523 = vld [vmem:[%s1 + $0x3d0] sm:$0xff]
      %v524 = vld [vmem:[%s1 + $0x3d8] sm:$0xff]
      %v525 = vld [vmem:[%s1 + $0x3e0] sm:$0xff]
      %v526 = vld [vmem:[%s1 + $0x3e8] sm:$0xff]
      %v527 = vld [vmem:[%s1 + $0x3f0] sm:$0xff]
      %v528 = vld [vmem:[%s1 + $0x3f8] sm:$0xff]
      %v529 = vld [vmem:[%s1 + $0x400] sm:$0xff]
      %v530 = vld [vmem:[%s1 + $0x408] sm:$0xff]
      %v531 = vld [vmem:[%s1 + $0x410] sm:$0xff]
      %v532 = vld [vmem:[%s1 + $0x418] sm:$0xff]
      %v533 = vld [vmem:[%s1 + $0x420] sm:$0xff]
      %v534 = vld [vmem:[%s1 + $0x428] sm:$0xff]
      %v535 = vld [vmem:[%s1 + $0x430] sm:$0xff]
      %v536 = vld [vmem:[%s1 + $0x438] sm:$0xff]
      %v537 = vld [vmem:[%s1 + $0x440] sm:$0xff]
      %v538 = vld [vmem:[%s1 + $0x448] sm:$0xff]
      %v539 = vld [vmem:[%s1 + $0x450] sm:$0xff]
      %v540 = vld [vmem:[%s1 + $0x458] sm:$0xff]
      %v541 = vld [vmem:[%s1 + $0x460] sm:$0xff]
      %v542 = vld [vmem:[%s1 + $0x468] sm:$0xff]
      %v543 = vld [vmem:[%s1 + $0x470] sm:$0xff]
      %v544 = vld [vmem:[%s1 + $0x478] sm:$0xff]
      %v545 = vld [vmem:[%s1 + $0x480] sm:$0xff]
      %v546 = vld [vmem:[%s1 + $0x488] sm:$0xff]
      %v547 = vld [vmem:[%s1 + $0x490] sm:$0xff]
      %v548 = vld [vmem:[%s1 + $0x498] sm:$0xff]
      %v549 = vld [vmem:[%s1 + $0x4a0] sm:$0xff]
      %v550 = vld [vmem:[%s1 + $0x4a8] sm:$0xff]
      %v551 = vld [vmem:[%s1 + $0x4b0] sm:$0xff]
      %v552 = vld [vmem:[%s1 + $0x4b8] sm:$0xff]
      %v553 = vld [vmem:[%s1 + $0x4c0] sm:$0xff]
      %v554 = vld [vmem:[%s1 + $0x4c8] sm:$0xff]
      %v555 = vld [vmem:[%s1 + $0x4d0] sm:$0xff]
      %v556 = vld [vmem:[%s1 + $0x4d8] sm:$0xff]
      %v557 = vld [vmem:[%s1 + $0x4e0] sm:$0xff]
      %v558 = vld [vmem:[%s1 + $0x4e8] sm:$0xff]
      %v559 = vld [vmem:[%s1 + $0x4f0] sm:$0xff]
      %v560 = vld [vmem:[%s1 + $0x4f8] sm:$0xff]
      %v561 = vld [vmem:[%s1 + $0x500] sm:$0xff]
      %v562 = vld [vmem:[%s1 + $0x508] sm:$0xff]
      %v563 = vld [vmem:[%s1 + $0x510] sm:$0xff]
      %v564 = vld [vmem:[%s1 + $0x518] sm:$0xff]
      %v565 = vld [vmem:[%s1 + $0x520] sm:$0xff]
      %v566 = vld [vmem:[%s1 + $0x528] sm:$0xff]
      %v567 = vld [vmem:[%s1 + $0x530] sm:$0xff]
      %v568 = vld [vmem:[%s1 + $0x538] sm:$0xff]
      %v569 = vld [vmem:[%s1 + $0x540] sm:$0xff]
      %v570 = vld [vmem:[%s1 + $0x548] sm:$0xff]
      %v571 = vld [vmem:[%s1 + $0x550] sm:$0xff]
      %v572 = vld [vmem:[%s1 + $0x558] sm:$0xff]
      %v573 = vld [vmem:[%s1 + $0x560] sm:$0xff]
      %v574 = vld [vmem:[%s1 + $0x568] sm:$0xff]
      %v575 = vld [vmem:[%s1 + $0x570] sm:$0xff]
      %v576 = vld [vmem:[%s1 + $0x578] sm:$0xff]
      %v577 = vld [vmem:[%s1 + $0x580] sm:$0xff]
      %v578 = vld [vmem:[%s1 + $0x588] sm:$0xff]
      %v579 = vld [vmem:[%s1 + $0x590] sm:$0xff]
      %v580 = vld [vmem:[%s1 + $0x598] sm:$0xff]
      %v581 = vld [vmem:[%s1 + $0x5a0] sm:$0xff]
      %v582 = vld [vmem:[%s1 + $0x5a8] sm:$0xff]
      %v583 = vld [vmem:[%s1 + $0x5b0] sm:$0xff]
      %v584 = vld [vmem:[%s1 + $0x5b8] sm:$0xff]
      %v585 = vld [vmem:[%s1 + $0x5c0] sm:$0xff]
      %v586 = vld [vmem:[%s1 + $0x5c8] sm:$0xff]
      %v587 = vld [vmem:[%s1 + $0x5d0] sm:$0xff]
      %v588 = vld [vmem:[%s1 + $0x5d8] sm:$0xff]
      %v589 = vld [vmem:[%s1 + $0x5e0] sm:$0xff]
      %v590 = vld [vmem:[%s1 + $0x5e8] sm:$0xff]
      %v591 = vld [vmem:[%s1 + $0x5f0] sm:$0xff]
      %v592 = vld [vmem:[%s1 + $0x5f8] sm:$0xff]
      %v593 = vld [vmem:[%s2] sm:$0x3]
      %v595 = vlaneseq
      %v596 = vshrl.u32 %v595, 7
      %v597 = vsub.s32 0, %v596
      %v598 = vrot.slane %v593, %v597
      %v599 = vlaneseq
      %v600 = vshrl.u32 %v599, 7
      %v601 = vsub.s32 1, %v600
      %v602 = vrot.slane %v593, %v601
      %605 = vmatprep.subr.mxu0 %v402
      %606 = vmatpush1.msra.mxu0 %v401
      %607 = vmatprep.subr.mxu0 %v404
      %608 = vmatpush1.msra.mxu0 %v403
      %609 = vmatprep.subr.mxu0 %v406
      %610 = vmatpush1.msra.mxu0 %v405
      %611 = vmatprep.subr.mxu0 %v408
      %612 = vmatpush1.msra.mxu0 %v407
      %613 = vmatprep.subr.mxu0 %v410
      %614 = vmatpush1.msra.mxu0 %v409
      %615 = vmatprep.subr.mxu0 %v412
      %616 = vmatpush1.msra.mxu0 %v411
      %617 = vmatprep.subr.mxu0 %v414
      %618 = vmatpush1.msra.mxu0 %v413
      %619 = vmatprep.subr.mxu0 %v416
      %620 = vmatpush1.msra.mxu0 %v415
      %621 = vmatprep.subr.mxu0 %v418
      %622 = vmatpush1.msra.mxu0 %v417
      %623 = vmatprep.subr.mxu0 %v420
      %624 = vmatpush1.msra.mxu0 %v419
      %625 = vmatprep.subr.mxu0 %v422
      %626 = vmatpush1.msra.mxu0 %v421
      %627 = vmatprep.subr.mxu0 %v424
      %628 = vmatpush1.msra.mxu0 %v423
      %629 = vmatprep.subr.mxu0 %v426
      %630 = vmatpush1.msra.mxu0 %v425
      %631 = vmatprep.subr.mxu0 %v428
      %632 = vmatpush1.msra.mxu0 %v427
      %633 = vmatprep.subr.mxu0 %v430
      %634 = vmatpush1.msra.mxu0 %v429
      %635 = vmatprep.subr.mxu0 %v432
      %636 = vmatpush1.msra.mxu0 %v431
      %637 = vmatprep.subr.mxu0 %v434
      %638 = vmatpush1.msra.mxu0 %v433
      %639 = vmatprep.subr.mxu0 %v436
      %640 = vmatpush1.msra.mxu0 %v435
      %641 = vmatprep.subr.mxu0 %v438
      %642 = vmatpush1.msra.mxu0 %v437
      %643 = vmatprep.subr.mxu0 %v440
      %644 = vmatpush1.msra.mxu0 %v439
      %645 = vmatprep.subr.mxu0 %v442
      %646 = vmatpush1.msra.mxu0 %v441
      %647 = vmatprep.subr.mxu0 %v444
      %648 = vmatpush1.msra.mxu0 %v443
      %649 = vmatprep.subr.mxu0 %v446
      %650 = vmatpush1.msra.mxu0 %v445
      %651 = vmatprep.subr.mxu0 %v448
      %652 = vmatpush1.msra.mxu0 %v447
      %653 = vmatprep.subr.mxu0 %v450
      %654 = vmatpush1.msra.mxu0 %v449
      %655 = vmatprep.subr.mxu0 %v452
      %656 = vmatpush1.msra.mxu0 %v451
      %657 = vmatprep.subr.mxu0 %v454
      %658 = vmatpush1.msra.mxu0 %v453
      %659 = vmatprep.subr.mxu0 %v456
      %660 = vmatpush1.msra.mxu0 %v455
      %661 = vmatprep.subr.mxu0 %v458
      %662 = vmatpush1.msra.mxu0 %v457
      %663 = vmatprep.subr.mxu0 %v460
      %664 = vmatpush1.msra.mxu0 %v459
      %665 = vmatprep.subr.mxu0 %v462
      %666 = vmatpush1.msra.mxu0 %v461
      %667 = vmatprep.subr.mxu0 %v464
      %668 = vmatpush1.msra.mxu0 %v463
      %669 = vmatprep.mubr.f32.mxu0 %v378
      %670 = vmatmul.mubr.f32.gmra.mrb[0].mxu0 %v377
      %v671 = vpop.f32.mrb[0].mxu0
      %v672 = vadd.f32 %v598, %v671
      %v673 = vpop.f32.mrb[0].mxu0
      %v674 = vadd.f32 %v602, %v673
      %675 = vmatprep.mubr.f32.mxu0 %v384
      %676 = vmatmul.mubr.f32.gmra.mrb[0].mxu0 %v383
      %v677 = vpop.f32.mrb[0].mxu0
      %v678 = vadd.f32 %v598, %v677
      %v679 = vpop.f32.mrb[0].mxu0
      %v680 = vadd.f32 %v602, %v679
      %681 = vmatprep.mubr.f32.mxu0 %v390
      %682 = vmatmul.mubr.f32.gmra.mrb[0].mxu0 %v389
      %v683 = vpop.f32.mrb[0].mxu0
      %v684 = vadd.f32 %v598, %v683
      %v685 = vpop.f32.mrb[0].mxu0
      %v686 = vadd.f32 %v602, %v685
      %687 = vmatprep.mubr.f32.mxu0 %v396
      %688 = vmatmul.mubr.f32.gmra.mrb[0].mxu0 %v395
      %v689 = vpop.f32.mrb[0].mxu0
      %v690 = vadd.f32 %v598, %v689
      %v691 = vpop.f32.mrb[0].mxu0
      %v692 = vadd.f32 %v602, %v691
      %693 = vdwg.mxu0
      %694 = vmatprep.subr.mxu0 %v466
      %695 = vmatpush1.msra.mxu0 %v465
      %696 = vmatprep.subr.mxu0 %v468
      %697 = vmatpush1.msra.mxu0 %v467
      %698 = vmatprep.subr.mxu0 %v470
      %699 = vmatpush1.msra.mxu0 %v469
      %700 = vmatprep.subr.mxu0 %v472
      %701 = vmatpush1.msra.mxu0 %v471
      %702 = vmatprep.subr.mxu0 %v474
      %703 = vmatpush1.msra.mxu0 %v473
      %704 = vmatprep.subr.mxu0 %v476
      %705 = vmatpush1.msra.mxu0 %v475
      %706 = vmatprep.subr.mxu0 %v478
      %707 = vmatpush1.msra.mxu0 %v477
      %708 = vmatprep.subr.mxu0 %v480
      %709 = vmatpush1.msra.mxu0 %v479
      %710 = vmatprep.subr.mxu0 %v482
      %711 = vmatpush1.msra.mxu0 %v481
      %712 = vmatprep.subr.mxu0 %v484
      %713 = vmatpush1.msra.mxu0 %v483
      %714 = vmatprep.subr.mxu0 %v486
      %715 = vmatpush1.msra.mxu0 %v485
      %716 = vmatprep.subr.mxu0 %v488
      %717 = vmatpush1.msra.mxu0 %v487
      %718 = vmatprep.subr.mxu0 %v490
      %719 = vmatpush1.msra.mxu0 %v489
      %720 = vmatprep.subr.mxu0 %v492
      %721 = vmatpush1.msra.mxu0 %v491
      %722 = vmatprep.subr.mxu0 %v494
      %723 = vmatpush1.msra.mxu0 %v493
      %724 = vmatprep.subr.mxu0 %v496
      %725 = vmatpush1.msra.mxu0 %v495
      %726 = vmatprep.subr.mxu0 %v498
      %727 = vmatpush1.msra.mxu0 %v497
      %728 = vmatprep.subr.mxu0 %v500
      %729 = vmatpush1.msra.mxu0 %v499
      %730 = vmatprep.subr.mxu0 %v502
      %731 = vmatpush1.msra.mxu0 %v501
      %732 = vmatprep.subr.mxu0 %v504
      %733 = vmatpush1.msra.mxu0 %v503
      %734 = vmatprep.subr.mxu0 %v506
      %735 = vmatpush1.msra.mxu0 %v505
      %736 = vmatprep.subr.mxu0 %v508
      %737 = vmatpush1.msra.mxu0 %v507
      %738 = vmatprep.subr.mxu0 %v510
      %739 = vmatpush1.msra.mxu0 %v509
      %740 = vmatprep.subr.mxu0 %v512
      %741 = vmatpush1.msra.mxu0 %v511
      %742 = vmatprep.subr.mxu0 %v514
      %743 = vmatpush1.msra.mxu0 %v513
      %744 = vmatprep.subr.mxu0 %v516
      %745 = vmatpush1.msra.mxu0 %v515
      %746 = vmatprep.subr.mxu0 %v518
      %747 = vmatpush1.msra.mxu0 %v517
      %748 = vmatprep.subr.mxu0 %v520
      %749 = vmatpush1.msra.mxu0 %v519
      %750 = vmatprep.subr.mxu0 %v522
      %751 = vmatpush1.msra.mxu0 %v521
      %752 = vmatprep.subr.mxu0 %v524
      %753 = vmatpush1.msra.mxu0 %v523
      %754 = vmatprep.subr.mxu0 %v526
      %755 = vmatpush1.msra.mxu0 %v525
      %756 = vmatprep.subr.mxu0 %v528
      %757 = vmatpush1.msra.mxu0 %v527
      %758 = vmatprep.mubr.f32.mxu0 %v380
      %759 = vmatmul.mubr.f32.gmra.mrb[0].mxu0 %v379
      %v760 = vpop.f32.mrb[0].mxu0
      %v761 = vadd.f32 %v672, %v760
      %v762 = vpop.f32.mrb[0].mxu0
      %v763 = vadd.f32 %v674, %v762
      %764 = vmatprep.mubr.f32.mxu0 %v386
      %765 = vmatmul.mubr.f32.gmra.mrb[0].mxu0 %v385
      %v766 = vpop.f32.mrb[0].mxu0
      %v767 = vadd.f32 %v678, %v766
      %v768 = vpop.f32.mrb[0].mxu0
      %v769 = vadd.f32 %v680, %v768
      %770 = vmatprep.mubr.f32.mxu0 %v392
      %771 = vmatmul.mubr.f32.gmra.mrb[0].mxu0 %v391
      %v772 = vpop.f32.mrb[0].mxu0
      %v773 = vadd.f32 %v684, %v772
      %v774 = vpop.f32.mrb[0].mxu0
      %v775 = vadd.f32 %v686, %v774
      %776 = vmatprep.mubr.f32.mxu0 %v398
      %777 = vmatmul.mubr.f32.gmra.mrb[0].mxu0 %v397
      %v778 = vpop.f32.mrb[0].mxu0
      %v779 = vadd.f32 %v690, %v778
      %v780 = vpop.f32.mrb[0].mxu0
      %v781 = vadd.f32 %v692, %v780
      %782 = vdwg.mxu0
      %783 = vmatprep.subr.mxu0 %v530
      %784 = vmatpush1.msra.mxu0 %v529
      %785 = vmatprep.subr.mxu0 %v532
      %786 = vmatpush1.msra.mxu0 %v531
      %787 = vmatprep.subr.mxu0 %v534
      %788 = vmatpush1.msra.mxu0 %v533
      %789 = vmatprep.subr.mxu0 %v536
      %790 = vmatpush1.msra.mxu0 %v535
      %791 = vmatprep.subr.mxu0 %v538
      %792 = vmatpush1.msra.mxu0 %v537
      %793 = vmatprep.subr.mxu0 %v540
      %794 = vmatpush1.msra.mxu0 %v539
      %795 = vmatprep.subr.mxu0 %v542
      %796 = vmatpush1.msra.mxu0 %v541
      %797 = vmatprep.subr.mxu0 %v544
      %798 = vmatpush1.msra.mxu0 %v543
      %799 = vmatprep.subr.mxu0 %v546
      %800 = vmatpush1.msra.mxu0 %v545
      %801 = vmatprep.subr.mxu0 %v548
      %802 = vmatpush1.msra.mxu0 %v547
      %803 = vmatprep.subr.mxu0 %v550
      %804 = vmatpush1.msra.mxu0 %v549
      %805 = vmatprep.subr.mxu0 %v552
      %806 = vmatpush1.msra.mxu0 %v551
      %807 = vmatprep.subr.mxu0 %v554
      %808 = vmatpush1.msra.mxu0 %v553
      %809 = vmatprep.subr.mxu0 %v556
      %810 = vmatpush1.msra.mxu0 %v555
      %811 = vmatprep.subr.mxu0 %v558
      %812 = vmatpush1.msra.mxu0 %v557
      %813 = vmatprep.subr.mxu0 %v560
      %814 = vmatpush1.msra.mxu0 %v559
      %815 = vmatprep.subr.mxu0 %v562
      %816 = vmatpush1.msra.mxu0 %v561
      %817 = vmatprep.subr.mxu0 %v564
      %818 = vmatpush1.msra.mxu0 %v563
      %819 = vmatprep.subr.mxu0 %v566
      %820 = vmatpush1.msra.mxu0 %v565
      %821 = vmatprep.subr.mxu0 %v568
      %822 = vmatpush1.msra.mxu0 %v567
      %823 = vmatprep.subr.mxu0 %v570
      %824 = vmatpush1.msra.mxu0 %v569
      %825 = vmatprep.subr.mxu0 %v572
      %826 = vmatpush1.msra.mxu0 %v571
      %827 = vmatprep.subr.mxu0 %v574
      %828 = vmatpush1.msra.mxu0 %v573
      %829 = vmatprep.subr.mxu0 %v576
      %830 = vmatpush1.msra.mxu0 %v575
      %831 = vmatprep.subr.mxu0 %v578
      %832 = vmatpush1.msra.mxu0 %v577
      %833 = vmatprep.subr.mxu0 %v580
      %834 = vmatpush1.msra.mxu0 %v579
      %835 = vmatprep.subr.mxu0 %v582
      %836 = vmatpush1.msra.mxu0 %v581
      %837 = vmatprep.subr.mxu0 %v584
      %838 = vmatpush1.msra.mxu0 %v583
      %839 = vmatprep.subr.mxu0 %v586
      %840 = vmatpush1.msra.mxu0 %v585
      %841 = vmatprep.subr.mxu0 %v588
      %842 = vmatpush1.msra.mxu0 %v587
      %843 = vmatprep.subr.mxu0 %v590
      %844 = vmatpush1.msra.mxu0 %v589
      %845 = vmatprep.subr.mxu0 %v592
      %846 = vmatpush1.msra.mxu0 %v591
      %847 = vmatprep.mubr.f32.mxu0 %v382
      %848 = vmatmul.mubr.f32.gmra.mrb[0].mxu0 %v381
      %v849 = vpop.f32.mrb[0].mxu0
      %v850 = vadd.f32 %v761, %v849
      %v851 = vpop.f32.mrb[0].mxu0
      %v852 = vadd.f32 %v763, %v851
      %853 = vmatprep.mubr.f32.mxu0 %v388
      %854 = vmatmul.mubr.f32.gmra.mrb[0].mxu0 %v387
      %v855 = vpop.f32.mrb[0].mxu0
      %v856 = vadd.f32 %v767, %v855
      %v857 = vpop.f32.mrb[0].mxu0
      %v858 = vadd.f32 %v769, %v857
      %859 = vmatprep.mubr.f32.mxu0 %v394
      %860 = vmatmul.mubr.f32.gmra.mrb[0].mxu0 %v393
      %v861 = vpop.f32.mrb[0].mxu0
      %v862 = vadd.f32 %v773, %v861
      %v863 = vpop.f32.mrb[0].mxu0
      %v864 = vadd.f32 %v775, %v863
      %865 = vmatprep.mubr.f32.mxu0 %v400
      %866 = vmatmul.mubr.f32.gmra.mrb[0].mxu0 %v399
      %v867 = vpop.f32.mrb[0].mxu0
      %v868 = vadd.f32 %v779, %v867
      %v869 = vpop.f32.mrb[0].mxu0
      %v870 = vadd.f32 %v781, %v869
      %871 = vdwg.mxu0
      %v872 = vmax.f32 %v850, 0.0
      %v873 = vmax.f32 %v852, 0.0
      %v874 = vmax.f32 %v856, 0.0
      %v875 = vmax.f32 %v858, 0.0
      %v876 = vmax.f32 %v862, 0.0
      %v877 = vmax.f32 %v864, 0.0
      %v878 = vmax.f32 %v868, 0.0
      %v879 = vmax.f32 %v870, 0.0
      %v880 = vld [vmem:[%s3] sm:$0xff]
      %v881 = vld [vmem:[%s3 + $0x8] sm:$0xff]
      %v882 = vld [vmem:[%s3 + $0x10] sm:$0xff]
      %v883 = vld [vmem:[%s3 + $0x18] sm:$0xff]
      %v884 = vld [vmem:[%s3 + $0x20] sm:$0xff]
      %v885 = vld [vmem:[%s3 + $0x28] sm:$0xff]
      %v886 = vld [vmem:[%s3 + $0x30] sm:$0xff]
      %v887 = vld [vmem:[%s3 + $0x38] sm:$0xff]
      %v888 = vld [vmem:[%s3 + $0x40] sm:$0xff]
      %v889 = vld [vmem:[%s3 + $0x48] sm:$0xff]
      %v890 = vld [vmem:[%s3 + $0x50] sm:$0xff]
      %v891 = vld [vmem:[%s3 + $0x58] sm:$0xff]
      %v892 = vld [vmem:[%s3 + $0x60] sm:$0xff]
      %v893 = vld [vmem:[%s3 + $0x68] sm:$0xff]
      %v894 = vld [vmem:[%s3 + $0x70] sm:$0xff]
      %v895 = vld [vmem:[%s3 + $0x78] sm:$0xff]
      %v896 = vld [vmem:[%s3 + $0x80] sm:$0xff]
      %v897 = vld [vmem:[%s3 + $0x88] sm:$0xff]
      %v898 = vld [vmem:[%s3 + $0x90] sm:$0xff]
      %v899 = vld [vmem:[%s3 + $0x98] sm:$0xff]
      %v900 = vld [vmem:[%s3 + $0xa0] sm:$0xff]
      %v901 = vld [vmem:[%s3 + $0xa8] sm:$0xff]
      %v902 = vld [vmem:[%s3 + $0xb0] sm:$0xff]
      %v903 = vld [vmem:[%s3 + $0xb8] sm:$0xff]
      %v904 = vld [vmem:[%s3 + $0xc0] sm:$0xff]
      %v905 = vld [vmem:[%s3 + $0xc8] sm:$0xff]
      %v906 = vld [vmem:[%s3 + $0xd0] sm:$0xff]
      %v907 = vld [vmem:[%s3 + $0xd8] sm:$0xff]
      %v908 = vld [vmem:[%s3 + $0xe0] sm:$0xff]
      %v909 = vld [vmem:[%s3 + $0xe8] sm:$0xff]
      %v910 = vld [vmem:[%s3 + $0xf0] sm:$0xff]
      %v911 = vld [vmem:[%s3 + $0xf8] sm:$0xff]
      %v912 = vld [vmem:[%s4] sm:$0x1]
      %v914 = vlaneseq
      %v915 = vshrl.u32 %v914, 7
      %v916 = vsub.s32 0, %v915
      %v917 = vrot.slane %v912, %v916
      %919 = vmatprep.subr.mxu0 0.0
      %920 = vmatpush1.msra.mxu0 %v880
      %921 = vmatprep.subr.mxu0 0.0
      %922 = vmatpush1.msra.mxu0 %v881
      %923 = vmatprep.subr.mxu0 0.0
      %924 = vmatpush1.msra.mxu0 %v882
      %925 = vmatprep.subr.mxu0 0.0
      %926 = vmatpush1.msra.mxu0 %v883
      %927 = vmatprep.subr.mxu0 0.0
      %928 = vmatpush1.msra.mxu0 %v884
      %929 = vmatprep.subr.mxu0 0.0
      %930 = vmatpush1.msra.mxu0 %v885
      %931 = vmatprep.subr.mxu0 0.0
      %932 = vmatpush1.msra.mxu0 %v886
      %933 = vmatprep.subr.mxu0 0.0
      %934 = vmatpush1.msra.mxu0 %v887
      %935 = vmatprep.subr.mxu0 0.0
      %936 = vmatpush1.msra.mxu0 %v888
      %937 = vmatprep.subr.mxu0 0.0
      %938 = vmatpush1.msra.mxu0 %v889
      %939 = vmatprep.subr.mxu0 0.0
      %940 = vmatpush1.msra.mxu0 %v890
      %941 = vmatprep.subr.mxu0 0.0
      %942 = vmatpush1.msra.mxu0 %v891
      %943 = vmatprep.subr.mxu0 0.0
      %944 = vmatpush1.msra.mxu0 %v892
      %945 = vmatprep.subr.mxu0 0.0
      %946 = vmatpush1.msra.mxu0 %v893
      %947 = vmatprep.subr.mxu0 0.0
      %948 = vmatpush1.msra.mxu0 %v894
      %949 = vmatprep.subr.mxu0 0.0
      %950 = vmatpush1.msra.mxu0 %v895
      %951 = vmatprep.subr.mxu0 0.0
      %952 = vmatpush1.msra.mxu0 %v896
      %953 = vmatprep.subr.mxu0 0.0
      %954 = vmatpush1.msra.mxu0 %v897
      %955 = vmatprep.subr.mxu0 0.0
      %956 = vmatpush1.msra.mxu0 %v898
      %957 = vmatprep.subr.mxu0 0.0
      %958 = vmatpush1.msra.mxu0 %v899
      %959 = vmatprep.subr.mxu0 0.0
      %960 = vmatpush1.msra.mxu0 %v900
      %961 = vmatprep.subr.mxu0 0.0
      %962 = vmatpush1.msra.mxu0 %v901
      %963 = vmatprep.subr.mxu0 0.0
      %964 = vmatpush1.msra.mxu0 %v902
      %965 = vmatprep.subr.mxu0 0.0
      %966 = vmatpush1.msra.mxu0 %v903
      %967 = vmatprep.subr.mxu0 0.0
      %968 = vmatpush1.msra.mxu0 %v904
      %969 = vmatprep.subr.mxu0 0.0
      %970 = vmatpush1.msra.mxu0 %v905
      %971 = vmatprep.subr.mxu0 0.0
      %972 = vmatpush1.msra.mxu0 %v906
      %973 = vmatprep.subr.mxu0 0.0
      %974 = vmatpush1.msra.mxu0 %v907
      %975 = vmatprep.subr.mxu0 0.0
      %976 = vmatpush1.msra.mxu0 %v908
      %977 = vmatprep.subr.mxu0 0.0
      %978 = vmatpush1.msra.mxu0 %v909
      %979 = vmatprep.subr.mxu0 0.0
      %980 = vmatpush1.msra.mxu0 %v910
      %981 = vmatprep.subr.mxu0 0.0
      %982 = vmatpush1.msra.mxu0 %v911
      %983 = vmatprep.mubr.f32.mxu0 %v873
      %984 = vmatmul.mubr.f32.gmra.mrb[0].mxu0 %v872
      %v985 = vpop.f32.mrb[0].mxu0
      %v986 = vadd.f32 %v917, %v985
      %v987 = vpop.f32.mrb[0].mxu0
      %988 = vmatprep.mubr.f32.mxu0 %v875
      %989 = vmatmul.mubr.f32.gmra.mrb[0].mxu0 %v874
      %v990 = vpop.f32.mrb[0].mxu0
      %v991 = vadd.f32 %v917, %v990
      %v992 = vpop.f32.mrb[0].mxu0
      %993 = vmatprep.mubr.f32.mxu0 %v877
      %994 = vmatmul.mubr.f32.gmra.mrb[0].mxu0 %v876
      %v995 = vpop.f32.mrb[0].mxu0
      %v996 = vadd.f32 %v917, %v995
      %v997 = vpop.f32.mrb[0].mxu0
      %998 = vmatprep.mubr.f32.mxu0 %v879
      %999 = vmatmul.mubr.f32.gmra.mrb[0].mxu0 %v878
      %v1000 = vpop.f32.mrb[0].mxu0
      %v1001 = vadd.f32 %v917, %v1000
      %v1002 = vpop.f32.mrb[0].mxu0
      %1003 = vdwg.mxu0
      %v1004 = vmax.f32 %v986, 0.0
      %v1005 = vmax.f32 %v991, 0.0
      %v1006 = vmax.f32 %v996, 0.0
      %v1007 = vmax.f32 %v1001, 0.0
      %s1008 = smul.u32 %s22, 32
      %s1009 = scalar_lea.vmem [#allocation2], %s1008
      %vm1010 = vcmask 261120
      %1011 = vst.msk [vmem:[%s1009] sm:$0xff] %vm1010, %v1004
      %1012 = vst.msk [vmem:[%s1009 + $0x8] sm:$0xff] %vm1010, %v1005
      %1013 = vst.msk [vmem:[%s1009 + $0x10] sm:$0xff] %vm1010, %v1006
      %1014 = vst.msk [vmem:[%s1009 + $0x18] sm:$0xff] %vm1010, %v1007
      %p1015 = scmp.eq.s32.totalorder %s22, 15
      // Predicated region
      $region65: #{encoder_forward.1} parent=63 // pred_check
        %p1016 = pneg %p1015
      $region66: #{encoder_forward.1} parent=63 // pred_check_branch
        %1018 = sbr.rel (%p1016) target = $region68
      $region67: #{encoder_forward.1} parent=63 // pred_region
        %v1019 = vld [vmem:[#allocation2] sm:$0xff]
        %v1020 = vld [vmem:[#allocation2 + $0x8] sm:$0xff]
        %v1021 = vld [vmem:[#allocation2 + $0x10] sm:$0xff]
        %v1022 = vld [vmem:[#allocation2 + $0x18] sm:$0xff]
        %v1023 = vld [vmem:[#allocation2 + $0x20] sm:$0xff]
        %v1024 = vld [vmem:[#allocation2 + $0x28] sm:$0xff]
        %v1025 = vld [vmem:[#allocation2 + $0x30] sm:$0xff]
        %v1026 = vld [vmem:[#allocation2 + $0x38] sm:$0xff]
        %v1027 = vld [vmem:[#allocation2 + $0x40] sm:$0xff]
        %v1028 = vld [vmem:[#allocation2 + $0x48] sm:$0xff]
        %v1029 = vld [vmem:[#allocation2 + $0x50] sm:$0xff]
        %v1030 = vld [vmem:[#allocation2 + $0x58] sm:$0xff]
        %v1031 = vld [vmem:[#allocation2 + $0x60] sm:$0xff]
        %v1032 = vld [vmem:[#allocation2 + $0x68] sm:$0xff]
        %v1033 = vld [vmem:[#allocation2 + $0x70] sm:$0xff]
        %v1034 = vld [vmem:[#allocation2 + $0x78] sm:$0xff]
        %v1035 = vld [vmem:[#allocation2 + $0x80] sm:$0xff]
        %v1036 = vld [vmem:[#allocation2 + $0x88] sm:$0xff]
        %v1037 = vld [vmem:[#allocation2 + $0x90] sm:$0xff]
        %v1038 = vld [vmem:[#allocation2 + $0x98] sm:$0xff]
        %v1039 = vld [vmem:[#allocation2 + $0xa0] sm:$0xff]
        %v1040 = vld [vmem:[#allocation2 + $0xa8] sm:$0xff]
        %v1041 = vld [vmem:[#allocation2 + $0xb0] sm:$0xff]
        %v1042 = vld [vmem:[#allocation2 + $0xb8] sm:$0xff]
        %v1043 = vld [vmem:[#allocation2 + $0xc0] sm:$0xff]
        %v1044 = vld [vmem:[#allocation2 + $0xc8] sm:$0xff]
        %v1045 = vld [vmem:[#allocation2 + $0xd0] sm:$0xff]
        %v1046 = vld [vmem:[#allocation2 + $0xd8] sm:$0xff]
        %v1047 = vld [vmem:[#allocation2 + $0xe0] sm:$0xff]
        %v1048 = vld [vmem:[#allocation2 + $0xe8] sm:$0xff]
        %v1049 = vld [vmem:[#allocation2 + $0xf0] sm:$0xff]
        %v1050 = vld [vmem:[#allocation2 + $0xf8] sm:$0xff]
        %v1051 = vld [vmem:[#allocation2 + $0x100] sm:$0xff]
        %v1052 = vld [vmem:[#allocation2 + $0x108] sm:$0xff]
        %v1053 = vld [vmem:[#allocation2 + $0x110] sm:$0xff]
        %v1054 = vld [vmem:[#allocation2 + $0x118] sm:$0xff]
        %v1055 = vld [vmem:[#allocation2 + $0x120] sm:$0xff]
        %v1056 = vld [vmem:[#allocation2 + $0x128] sm:$0xff]
        %v1057 = vld [vmem:[#allocation2 + $0x130] sm:$0xff]
        %v1058 = vld [vmem:[#allocation2 + $0x138] sm:$0xff]
        %v1059 = vld [vmem:[#allocation2 + $0x140] sm:$0xff]
        %v1060 = vld [vmem:[#allocation2 + $0x148] sm:$0xff]
        %v1061 = vld [vmem:[#allocation2 + $0x150] sm:$0xff]
        %v1062 = vld [vmem:[#allocation2 + $0x158] sm:$0xff]
        %v1063 = vld [vmem:[#allocation2 + $0x160] sm:$0xff]
        %v1064 = vld [vmem:[#allocation2 + $0x168] sm:$0xff]
        %v1065 = vld [vmem:[#allocation2 + $0x170] sm:$0xff]
        %v1066 = vld [vmem:[#allocation2 + $0x178] sm:$0xff]
        %v1067 = vld [vmem:[#allocation2 + $0x180] sm:$0xff]
        %v1068 = vld [vmem:[#allocation2 + $0x188] sm:$0xff]
        %v1069 = vld [vmem:[#allocation2 + $0x190] sm:$0xff]
        %v1070 = vld [vmem:[#allocation2 + $0x198] sm:$0xff]
        %v1071 = vld [vmem:[#allocation2 + $0x1a0] sm:$0xff]
        %v1072 = vld [vmem:[#allocation2 + $0x1a8] sm:$0xff]
        %v1073 = vld [vmem:[#allocation2 + $0x1b0] sm:$0xff]
        %v1074 = vld [vmem:[#allocation2 + $0x1b8] sm:$0xff]
        %v1075 = vld [vmem:[#allocation2 + $0x1c0] sm:$0xff]
        %v1076 = vld [vmem:[#allocation2 + $0x1c8] sm:$0xff]
        %v1077 = vld [vmem:[#allocation2 + $0x1d0] sm:$0xff]
        %v1078 = vld [vmem:[#allocation2 + $0x1d8] sm:$0xff]
        %v1079 = vld [vmem:[#allocation2 + $0x1e0] sm:$0xff]
        %v1080 = vld [vmem:[#allocation2 + $0x1e8] sm:$0xff]
        %v1081 = vld [vmem:[#allocation2 + $0x1f0] sm:$0xff]
        %v1082 = vld [vmem:[#allocation2 + $0x1f8] sm:$0xff]
        %1087 = vrot.lane.b32.xlu0 %v1023, 32
        %v1088 = vpop.permute.xlu0 %1087
        %1089 = vrot.lane.b32.xlu0 %v1024, 32
        %v1090 = vpop.permute.xlu0 %1089
        %1091 = vrot.lane.b32.xlu0 %v1025, 32
        %v1092 = vpop.permute.xlu0 %1091
        %1093 = vrot.lane.b32.xlu0 %v1026, 32
        %v1094 = vpop.permute.xlu0 %1093
        %1103 = vrot.lane.b32.xlu0 %v1027, 64
        %v1104 = vpop.permute.xlu0 %1103
        %1105 = vrot.lane.b32.xlu0 %v1028, 64
        %v1106 = vpop.permute.xlu0 %1105
        %1107 = vrot.lane.b32.xlu0 %v1029, 64
        %v1108 = vpop.permute.xlu0 %1107
        %1109 = vrot.lane.b32.xlu0 %v1030, 64
        %v1110 = vpop.permute.xlu0 %1109
        %1119 = vrot.lane.b32.xlu0 %v1031, 96
        %v1120 = vpop.permute.xlu0 %1119
        %1121 = vrot.lane.b32.xlu0 %v1032, 96
        %v1122 = vpop.permute.xlu0 %1121
        %1123 = vrot.lane.b32.xlu0 %v1033, 96
        %v1124 = vpop.permute.xlu0 %1123
        %1125 = vrot.lane.b32.xlu0 %v1034, 96
        %v1126 = vpop.permute.xlu0 %1125
        %1135 = vrot.lane.b32.xlu0 %v1039, 32
        %v1136 = vpop.permute.xlu0 %1135
        %1137 = vrot.lane.b32.xlu0 %v1040, 32
        %v1138 = vpop.permute.xlu0 %1137
        %1139 = vrot.lane.b32.xlu0 %v1041, 32
        %v1140 = vpop.permute.xlu0 %1139
        %1141 = vrot.lane.b32.xlu0 %v1042, 32
        %v1142 = vpop.permute.xlu0 %1141
        %1151 = vrot.lane.b32.xlu0 %v1043, 64
        %v1152 = vpop.permute.xlu0 %1151
        %1153 = vrot.lane.b32.xlu0 %v1044, 64
        %v1154 = vpop.permute.xlu0 %1153
        %1155 = vrot.lane.b32.xlu0 %v1045, 64
        %v1156 = vpop.permute.xlu0 %1155
        %1157 = vrot.lane.b32.xlu0 %v1046, 64
        %v1158 = vpop.permute.xlu0 %1157
        %1167 = vrot.lane.b32.xlu0 %v1047, 96
        %v1168 = vpop.permute.xlu0 %1167
        %1169 = vrot.lane.b32.xlu0 %v1048, 96
        %v1170 = vpop.permute.xlu0 %1169
        %1171 = vrot.lane.b32.xlu0 %v1049, 96
        %v1172 = vpop.permute.xlu0 %1171
        %1173 = vrot.lane.b32.xlu0 %v1050, 96
        %v1174 = vpop.permute.xlu0 %1173
        %1183 = vrot.lane.b32.xlu0 %v1055, 32
        %v1184 = vpop.permute.xlu0 %1183
        %1185 = vrot.lane.b32.xlu0 %v1056, 32
        %v1186 = vpop.permute.xlu0 %1185
        %1187 = vrot.lane.b32.xlu0 %v1057, 32
        %v1188 = vpop.permute.xlu0 %1187
        %1189 = vrot.lane.b32.xlu0 %v1058, 32
        %v1190 = vpop.permute.xlu0 %1189
        %1199 = vrot.lane.b32.xlu0 %v1059, 64
        %v1200 = vpop.permute.xlu0 %1199
        %1201 = vrot.lane.b32.xlu0 %v1060, 64
        %v1202 = vpop.permute.xlu0 %1201
        %1203 = vrot.lane.b32.xlu0 %v1061, 64
        %v1204 = vpop.permute.xlu0 %1203
        %1205 = vrot.lane.b32.xlu0 %v1062, 64
        %v1206 = vpop.permute.xlu0 %1205
        %1215 = vrot.lane.b32.xlu0 %v1063, 96
        %v1216 = vpop.permute.xlu0 %1215
        %1217 = vrot.lane.b32.xlu0 %v1064, 96
        %v1218 = vpop.permute.xlu0 %1217
        %1219 = vrot.lane.b32.xlu0 %v1065, 96
        %v1220 = vpop.permute.xlu0 %1219
        %1221 = vrot.lane.b32.xlu0 %v1066, 96
        %v1222 = vpop.permute.xlu0 %1221
        %1231 = vrot.lane.b32.xlu0 %v1071, 32
        %v1232 = vpop.permute.xlu0 %1231
        %1233 = vrot.lane.b32.xlu0 %v1072, 32
        %v1234 = vpop.permute.xlu0 %1233
        %1235 = vrot.lane.b32.xlu0 %v1073, 32
        %v1236 = vpop.permute.xlu0 %1235
        %1237 = vrot.lane.b32.xlu0 %v1074, 32
        %v1238 = vpop.permute.xlu0 %1237
        %1247 = vrot.lane.b32.xlu0 %v1075, 64
        %v1248 = vpop.permute.xlu0 %1247
        %1249 = vrot.lane.b32.xlu0 %v1076, 64
        %v1250 = vpop.permute.xlu0 %1249
        %1251 = vrot.lane.b32.xlu0 %v1077, 64
        %v1252 = vpop.permute.xlu0 %1251
        %1253 = vrot.lane.b32.xlu0 %v1078, 64
        %v1254 = vpop.permute.xlu0 %1253
        %1263 = vrot.lane.b32.xlu0 %v1079, 96
        %v1264 = vpop.permute.xlu0 %1263
        %1265 = vrot.lane.b32.xlu0 %v1080, 96
        %v1266 = vpop.permute.xlu0 %1265
        %1267 = vrot.lane.b32.xlu0 %v1081, 96
        %v1268 = vpop.permute.xlu0 %1267
        %1269 = vrot.lane.b32.xlu0 %v1082, 96
        %v1270 = vpop.permute.xlu0 %1269
        %v1275 = vsel %vm1010, %v1019, %v1088
        %v1276 = vsel %vm1010, %v1020, %v1090
        %v1277 = vsel %vm1010, %v1021, %v1092
        %v1278 = vsel %vm1010, %v1022, %v1094
        %vm1279 = vcmask 523264
        %v1280 = vsel %vm1279, %v1275, %v1104
        %v1281 = vsel %vm1279, %v1276, %v1106
        %v1282 = vsel %vm1279, %v1277, %v1108
        %v1283 = vsel %vm1279, %v1278, %v1110
        %vm1284 = vcmask 785408
        %v1285 = vsel %vm1284, %v1280, %v1120
        %v1286 = vsel %vm1284, %v1281, %v1122
        %v1287 = vsel %vm1284, %v1282, %v1124
        %v1288 = vsel %vm1284, %v1283, %v1126
        %v1289 = vsel %vm1010, %v1035, %v1136
        %v1290 = vsel %vm1010, %v1036, %v1138
        %v1291 = vsel %vm1010, %v1037, %v1140
        %v1292 = vsel %vm1010, %v1038, %v1142
        %v1293 = vsel %vm1279, %v1289, %v1152
        %v1294 = vsel %vm1279, %v1290, %v1154
        %v1295 = vsel %vm1279, %v1291, %v1156
        %v1296 = vsel %vm1279, %v1292, %v1158
        %v1297 = vsel %vm1284, %v1293, %v1168
        %v1298 = vsel %vm1284, %v1294, %v1170
        %v1299 = vsel %vm1284, %v1295, %v1172
        %v1300 = vsel %vm1284, %v1296, %v1174
        %v1301 = vsel %vm1010, %v1051, %v1184
        %v1302 = vsel %vm1010, %v1052, %v1186
        %v1303 = vsel %vm1010, %v1053, %v1188
        %v1304 = vsel %vm1010, %v1054, %v1190
        %v1305 = vsel %vm1279, %v1301, %v1200
        %v1306 = vsel %vm1279, %v1302, %v1202
        %v1307 = vsel %vm1279, %v1303, %v1204
        %v1308 = vsel %vm1279, %v1304, %v1206
        %v1309 = vsel %vm1284, %v1305, %v1216
        %v1310 = vsel %vm1284, %v1306, %v1218
        %v1311 = vsel %vm1284, %v1307, %v1220
        %v1312 = vsel %vm1284, %v1308, %v1222
        %v1313 = vsel %vm1010, %v1067, %v1232
        %v1314 = vsel %vm1010, %v1068, %v1234
        %v1315 = vsel %vm1010, %v1069, %v1236
        %v1316 = vsel %vm1010, %v1070, %v1238
        %v1317 = vsel %vm1279, %v1313, %v1248
        %v1318 = vsel %vm1279, %v1314, %v1250
        %v1319 = vsel %vm1279, %v1315, %v1252
        %v1320 = vsel %vm1279, %v1316, %v1254
        %v1321 = vsel %vm1284, %v1317, %v1264
        %v1322 = vsel %vm1284, %v1318, %v1266
        %v1323 = vsel %vm1284, %v1319, %v1268
        %v1324 = vsel %vm1284, %v1320, %v1270
        %v1325 = vld [vmem:[%s5] sm:$0xff]
        %v1326 = vld [vmem:[%s5 + $0x8] sm:$0xff]
        %v1327 = vld [vmem:[%s5 + $0x10] sm:$0xff]
        %v1328 = vld [vmem:[%s5 + $0x18] sm:$0xff]
        %v1329 = vld [vmem:[%s5 + $0x20] sm:$0xff]
        %v1330 = vld [vmem:[%s5 + $0x28] sm:$0xff]
        %v1331 = vld [vmem:[%s5 + $0x30] sm:$0xff]
        %v1332 = vld [vmem:[%s5 + $0x38] sm:$0xff]
        %v1333 = vld [vmem:[%s5 + $0x40] sm:$0xff]
        %v1334 = vld [vmem:[%s5 + $0x48] sm:$0xff]
        %v1335 = vld [vmem:[%s5 + $0x50] sm:$0xff]
        %v1336 = vld [vmem:[%s5 + $0x58] sm:$0xff]
        %v1337 = vld [vmem:[%s5 + $0x60] sm:$0xff]
        %v1338 = vld [vmem:[%s5 + $0x68] sm:$0xff]
        %v1339 = vld [vmem:[%s5 + $0x70] sm:$0xff]
        %v1340 = vld [vmem:[%s5 + $0x78] sm:$0xff]
        %v1341 = vld [vmem:[%s5 + $0x80] sm:$0xff]
        %v1342 = vld [vmem:[%s5 + $0x88] sm:$0xff]
        %v1343 = vld [vmem:[%s5 + $0x90] sm:$0xff]
        %v1344 = vld [vmem:[%s5 + $0x98] sm:$0xff]
        %v1345 = vld [vmem:[%s5 + $0xa0] sm:$0xff]
        %v1346 = vld [vmem:[%s5 + $0xa8] sm:$0xff]
        %v1347 = vld [vmem:[%s5 + $0xb0] sm:$0xff]
        %v1348 = vld [vmem:[%s5 + $0xb8] sm:$0xff]
        %v1349 = vld [vmem:[%s5 + $0xc0] sm:$0xff]
        %v1350 = vld [vmem:[%s5 + $0xc8] sm:$0xff]
        %v1351 = vld [vmem:[%s5 + $0xd0] sm:$0xff]
        %v1352 = vld [vmem:[%s5 + $0xd8] sm:$0xff]
        %v1353 = vld [vmem:[%s5 + $0xe0] sm:$0xff]
        %v1354 = vld [vmem:[%s5 + $0xe8] sm:$0xff]
        %v1355 = vld [vmem:[%s5 + $0xf0] sm:$0xff]
        %v1356 = vld [vmem:[%s5 + $0xf8] sm:$0xff]
        %v1357 = vld [vmem:[%s5 + $0x100] sm:$0xff]
        %v1358 = vld [vmem:[%s5 + $0x108] sm:$0xff]
        %v1359 = vld [vmem:[%s5 + $0x110] sm:$0xff]
        %v1360 = vld [vmem:[%s5 + $0x118] sm:$0xff]
        %v1361 = vld [vmem:[%s5 + $0x120] sm:$0xff]
        %v1362 = vld [vmem:[%s5 + $0x128] sm:$0xff]
        %v1363 = vld [vmem:[%s5 + $0x130] sm:$0xff]
        %v1364 = vld [vmem:[%s5 + $0x138] sm:$0xff]
        %v1365 = vld [vmem:[%s5 + $0x140] sm:$0xff]
        %v1366 = vld [vmem:[%s5 + $0x148] sm:$0xff]
        %v1367 = vld [vmem:[%s5 + $0x150] sm:$0xff]
        %v1368 = vld [vmem:[%s5 + $0x158] sm:$0xff]
        %v1369 = vld [vmem:[%s5 + $0x160] sm:$0xff]
        %v1370 = vld [vmem:[%s5 + $0x168] sm:$0xff]
        %v1371 = vld [vmem:[%s5 + $0x170] sm:$0xff]
        %v1372 = vld [vmem:[%s5 + $0x178] sm:$0xff]
        %v1373 = vld [vmem:[%s5 + $0x180] sm:$0xff]
        %v1374 = vld [vmem:[%s5 + $0x188] sm:$0xff]
        %v1375 = vld [vmem:[%s5 + $0x190] sm:$0xff]
        %v1376 = vld [vmem:[%s5 + $0x198] sm:$0xff]
        %v1377 = vld [vmem:[%s5 + $0x1a0] sm:$0xff]
        %v1378 = vld [vmem:[%s5 + $0x1a8] sm:$0xff]
        %v1379 = vld [vmem:[%s5 + $0x1b0] sm:$0xff]
        %v1380 = vld [vmem:[%s5 + $0x1b8] sm:$0xff]
        %v1381 = vld [vmem:[%s5 + $0x1c0] sm:$0xff]
        %v1382 = vld [vmem:[%s5 + $0x1c8] sm:$0xff]
        %v1383 = vld [vmem:[%s5 + $0x1d0] sm:$0xff]
        %v1384 = vld [vmem:[%s5 + $0x1d8] sm:$0xff]
        %v1385 = vld [vmem:[%s5 + $0x1e0] sm:$0xff]
        %v1386 = vld [vmem:[%s5 + $0x1e8] sm:$0xff]
        %v1387 = vld [vmem:[%s5 + $0x1f0] sm:$0xff]
        %v1388 = vld [vmem:[%s5 + $0x1f8] sm:$0xff]
        %v1389 = vld [vmem:[%s6] sm:$0x1]
        %v1391 = vlaneseq
        %v1392 = vshrl.u32 %v1391, 7
        %v1393 = vsub.s32 0, %v1392
        %v1394 = vrot.slane %v1389, %v1393
        %1396 = vmatprep.subr.mxu0 0.0
        %1397 = vmatpush1.msra.mxu0 %v1325
        %1398 = vmatprep.subr.mxu0 0.0
        %1399 = vmatpush1.msra.mxu0 %v1326
        %1400 = vmatprep.subr.mxu0 0.0
        %1401 = vmatpush1.msra.mxu0 %v1327
        %1402 = vmatprep.subr.mxu0 0.0
        %1403 = vmatpush1.msra.mxu0 %v1328
        %1404 = vmatprep.subr.mxu0 0.0
        %1405 = vmatpush1.msra.mxu0 %v1329
        %1406 = vmatprep.subr.mxu0 0.0
        %1407 = vmatpush1.msra.mxu0 %v1330
        %1408 = vmatprep.subr.mxu0 0.0
        %1409 = vmatpush1.msra.mxu0 %v1331
        %1410 = vmatprep.subr.mxu0 0.0
        %1411 = vmatpush1.msra.mxu0 %v1332
        %1412 = vmatprep.subr.mxu0 0.0
        %1413 = vmatpush1.msra.mxu0 %v1333
        %1414 = vmatprep.subr.mxu0 0.0
        %1415 = vmatpush1.msra.mxu0 %v1334
        %1416 = vmatprep.subr.mxu0 0.0
        %1417 = vmatpush1.msra.mxu0 %v1335
        %1418 = vmatprep.subr.mxu0 0.0
        %1419 = vmatpush1.msra.mxu0 %v1336
        %1420 = vmatprep.subr.mxu0 0.0
        %1421 = vmatpush1.msra.mxu0 %v1337
        %1422 = vmatprep.subr.mxu0 0.0
        %1423 = vmatpush1.msra.mxu0 %v1338
        %1424 = vmatprep.subr.mxu0 0.0
        %1425 = vmatpush1.msra.mxu0 %v1339
        %1426 = vmatprep.subr.mxu0 0.0
        %1427 = vmatpush1.msra.mxu0 %v1340
        %1428 = vmatprep.subr.mxu0 0.0
        %1429 = vmatpush1.msra.mxu0 %v1341
        %1430 = vmatprep.subr.mxu0 0.0
        %1431 = vmatpush1.msra.mxu0 %v1342
        %1432 = vmatprep.subr.mxu0 0.0
        %1433 = vmatpush1.msra.mxu0 %v1343
        %1434 = vmatprep.subr.mxu0 0.0
        %1435 = vmatpush1.msra.mxu0 %v1344
        %1436 = vmatprep.subr.mxu0 0.0
        %1437 = vmatpush1.msra.mxu0 %v1345
        %1438 = vmatprep.subr.mxu0 0.0
        %1439 = vmatpush1.msra.mxu0 %v1346
        %1440 = vmatprep.subr.mxu0 0.0
        %1441 = vmatpush1.msra.mxu0 %v1347
        %1442 = vmatprep.subr.mxu0 0.0
        %1443 = vmatpush1.msra.mxu0 %v1348
        %1444 = vmatprep.subr.mxu0 0.0
        %1445 = vmatpush1.msra.mxu0 %v1349
        %1446 = vmatprep.subr.mxu0 0.0
        %1447 = vmatpush1.msra.mxu0 %v1350
        %1448 = vmatprep.subr.mxu0 0.0
        %1449 = vmatpush1.msra.mxu0 %v1351
        %1450 = vmatprep.subr.mxu0 0.0
        %1451 = vmatpush1.msra.mxu0 %v1352
        %1452 = vmatprep.subr.mxu0 0.0
        %1453 = vmatpush1.msra.mxu0 %v1353
        %1454 = vmatprep.subr.mxu0 0.0
        %1455 = vmatpush1.msra.mxu0 %v1354
        %1456 = vmatprep.subr.mxu0 0.0
        %1457 = vmatpush1.msra.mxu0 %v1355
        %1458 = vmatprep.subr.mxu0 0.0
        %1459 = vmatpush1.msra.mxu0 %v1356
        %1460 = vmatprep.mubr.f32.mxu0 %v1297
        %1461 = vmatmul.mubr.f32.gmra.mrb[0].mxu0 %v1285
        %v1462 = vpop.f32.mrb[0].mxu0
        %v1463 = vadd.f32 %v1394, %v1462
        %v1464 = vpop.f32.mrb[0].mxu0
        %1465 = vmatprep.mubr.f32.mxu0 %v1298
        %1466 = vmatmul.mubr.f32.gmra.mrb[0].mxu0 %v1286
        %v1467 = vpop.f32.mrb[0].mxu0
        %v1468 = vadd.f32 %v1394, %v1467
        %v1469 = vpop.f32.mrb[0].mxu0
        %1470 = vmatprep.mubr.f32.mxu0 %v1299
        %1471 = vmatmul.mubr.f32.gmra.mrb[0].mxu0 %v1287
        %v1472 = vpop.f32.mrb[0].mxu0
        %v1473 = vadd.f32 %v1394, %v1472
        %v1474 = vpop.f32.mrb[0].mxu0
        %1475 = vmatprep.mubr.f32.mxu0 %v1300
        %1476 = vmatmul.mubr.f32.gmra.mrb[0].mxu0 %v1288
        %v1477 = vpop.f32.mrb[0].mxu0
        %v1478 = vadd.f32 %v1394, %v1477
        %v1479 = vpop.f32.mrb[0].mxu0
        %1480 = vdwg.mxu0
        %1481 = vmatprep.subr.mxu0 0.0
        %1482 = vmatpush1.msra.mxu0 %v1357
        %1483 = vmatprep.subr.mxu0 0.0
        %1484 = vmatpush1.msra.mxu0 %v1358
        %1485 = vmatprep.subr.mxu0 0.0
        %1486 = vmatpush1.msra.mxu0 %v1359
        %1487 = vmatprep.subr.mxu0 0.0
        %1488 = vmatpush1.msra.mxu0 %v1360
        %1489 = vmatprep.subr.mxu0 0.0
        %1490 = vmatpush1.msra.mxu0 %v1361
        %1491 = vmatprep.subr.mxu0 0.0
        %1492 = vmatpush1.msra.mxu0 %v1362
        %1493 = vmatprep.subr.mxu0 0.0
        %1494 = vmatpush1.msra.mxu0 %v1363
        %1495 = vmatprep.subr.mxu0 0.0
        %1496 = vmatpush1.msra.mxu0 %v1364
        %1497 = vmatprep.subr.mxu0 0.0
        %1498 = vmatpush1.msra.mxu0 %v1365
        %1499 = vmatprep.subr.mxu0 0.0
        %1500 = vmatpush1.msra.mxu0 %v1366
        %1501 = vmatprep.subr.mxu0 0.0
        %1502 = vmatpush1.msra.mxu0 %v1367
        %1503 = vmatprep.subr.mxu0 0.0
        %1504 = vmatpush1.msra.mxu0 %v1368
        %1505 = vmatprep.subr.mxu0 0.0
        %1506 = vmatpush1.msra.mxu0 %v1369
        %1507 = vmatprep.subr.mxu0 0.0
        %1508 = vmatpush1.msra.mxu0 %v1370
        %1509 = vmatprep.subr.mxu0 0.0
        %1510 = vmatpush1.msra.mxu0 %v1371
        %1511 = vmatprep.subr.mxu0 0.0
        %1512 = vmatpush1.msra.mxu0 %v1372
        %1513 = vmatprep.subr.mxu0 0.0
        %1514 = vmatpush1.msra.mxu0 %v1373
        %1515 = vmatprep.subr.mxu0 0.0
        %1516 = vmatpush1.msra.mxu0 %v1374
        %1517 = vmatprep.subr.mxu0 0.0
        %1518 = vmatpush1.msra.mxu0 %v1375
        %1519 = vmatprep.subr.mxu0 0.0
        %1520 = vmatpush1.msra.mxu0 %v1376
        %1521 = vmatprep.subr.mxu0 0.0
        %1522 = vmatpush1.msra.mxu0 %v1377
        %1523 = vmatprep.subr.mxu0 0.0
        %1524 = vmatpush1.msra.mxu0 %v1378
        %1525 = vmatprep.subr.mxu0 0.0
        %1526 = vmatpush1.msra.mxu0 %v1379
        %1527 = vmatprep.subr.mxu0 0.0
        %1528 = vmatpush1.msra.mxu0 %v1380
        %1529 = vmatprep.subr.mxu0 0.0
        %1530 = vmatpush1.msra.mxu0 %v1381
        %1531 = vmatprep.subr.mxu0 0.0
        %1532 = vmatpush1.msra.mxu0 %v1382
        %1533 = vmatprep.subr.mxu0 0.0
        %1534 = vmatpush1.msra.mxu0 %v1383
        %1535 = vmatprep.subr.mxu0 0.0
        %1536 = vmatpush1.msra.mxu0 %v1384
        %1537 = vmatprep.subr.mxu0 0.0
        %1538 = vmatpush1.msra.mxu0 %v1385
        %1539 = vmatprep.subr.mxu0 0.0
        %1540 = vmatpush1.msra.mxu0 %v1386
        %1541 = vmatprep.subr.mxu0 0.0
        %1542 = vmatpush1.msra.mxu0 %v1387
        %1543 = vmatprep.subr.mxu0 0.0
        %1544 = vmatpush1.msra.mxu0 %v1388
        %1545 = vmatprep.mubr.f32.mxu0 %v1321
        %1546 = vmatmul.mubr.f32.gmra.mrb[0].mxu0 %v1309
        %v1547 = vpop.f32.mrb[0].mxu0
        %v1548 = vadd.f32 %v1463, %v1547
        %v1549 = vpop.f32.mrb[0].mxu0
        %1550 = vmatprep.mubr.f32.mxu0 %v1322
        %1551 = vmatmul.mubr.f32.gmra.mrb[0].mxu0 %v1310
        %v1552 = vpop.f32.mrb[0].mxu0
        %v1553 = vadd.f32 %v1468, %v1552
        %v1554 = vpop.f32.mrb[0].mxu0
        %1555 = vmatprep.mubr.f32.mxu0 %v1323
        %1556 = vmatmul.mubr.f32.gmra.mrb[0].mxu0 %v1311
        %v1557 = vpop.f32.mrb[0].mxu0
        %v1558 = vadd.f32 %v1473, %v1557
        %v1559 = vpop.f32.mrb[0].mxu0
        %1560 = vmatprep.mubr.f32.mxu0 %v1324
        %1561 = vmatmul.mubr.f32.gmra.mrb[0].mxu0 %v1312
        %v1562 = vpop.f32.mrb[0].mxu0
        %v1563 = vadd.f32 %v1478, %v1562
        %v1564 = vpop.f32.mrb[0].mxu0
        %1565 = vdwg.mxu0
        %v1566 = vmax.f32 %v1548, 0.0
        %v1567 = vmax.f32 %v1553, 0.0
        %v1568 = vmax.f32 %v1558, 0.0
        %v1569 = vmax.f32 %v1563, 0.0
        %v1571 = vrot.slane %v1566, 2
        %1572 = vrot.lane.b32.xlu0 %v1571, 16
        %v1573 = vpop.permute.xlu0 %1572
        %v1575 = vrot.slane %v1566, 4
        %1576 = vrot.lane.b32.xlu0 %v1575, 32
        %v1577 = vpop.permute.xlu0 %1576
        %v1579 = vrot.slane %v1566, 6
        %1580 = vrot.lane.b32.xlu0 %v1579, 48
        %v1581 = vpop.permute.xlu0 %1580
        %1584 = vrot.lane.b32.xlu0 %v1567, 64
        %v1585 = vpop.permute.xlu0 %1584
        %v1587 = vrot.slane %v1567, 2
        %1588 = vrot.lane.b32.xlu0 %v1587, 80
        %v1589 = vpop.permute.xlu0 %1588
        %v1591 = vrot.slane %v1567, 4
        %1592 = vrot.lane.b32.xlu0 %v1591, 96
        %v1593 = vpop.permute.xlu0 %1592
        %v1595 = vrot.slane %v1567, 6
        %1596 = vrot.lane.b32.xlu0 %v1595, 112
        %v1597 = vpop.permute.xlu0 %1596
        %v1600 = vrot.slane %v1568, 2
        %1601 = vrot.lane.b32.xlu0 %v1600, 16
        %v1602 = vpop.permute.xlu0 %1601
        %v1604 = vrot.slane %v1568, 4
        %1605 = vrot.lane.b32.xlu0 %v1604, 32
        %v1606 = vpop.permute.xlu0 %1605
        %v1608 = vrot.slane %v1568, 6
        %1609 = vrot.lane.b32.xlu0 %v1608, 48
        %v1610 = vpop.permute.xlu0 %1609
        %1613 = vrot.lane.b32.xlu0 %v1569, 64
        %v1614 = vpop.permute.xlu0 %1613
        %v1616 = vrot.slane %v1569, 2
        %1617 = vrot.lane.b32.xlu0 %v1616, 80
        %v1618 = vpop.permute.xlu0 %1617
        %v1620 = vrot.slane %v1569, 4
        %1621 = vrot.lane.b32.xlu0 %v1620, 96
        %v1622 = vpop.permute.xlu0 %1621
        %v1624 = vrot.slane %v1569, 6
        %1625 = vrot.lane.b32.xlu0 %v1624, 112
        %v1626 = vpop.permute.xlu0 %1625
        %vm1628 = vcmask 130048
        %v1629 = vsel %vm1628, %v1566, %v1573
        %v1630 = vsel %vm1010, %v1629, %v1577
        %vm1631 = vcmask 392192
        %v1632 = vsel %vm1631, %v1630, %v1581
        %v1633 = vsel %vm1279, %v1632, %v1585
        %vm1634 = vcmask 654336
        %v1635 = vsel %vm1634, %v1633, %v1589
        %v1636 = vsel %vm1284, %v1635, %v1593
        %vm1637 = vcmask 916480
        %v1638 = vsel %vm1637, %v1636, %v1597
        %v1639 = vsel %vm1628, %v1568, %v1602
        %v1640 = vsel %vm1010, %v1639, %v1606
        %v1641 = vsel %vm1631, %v1640, %v1610
        %v1642 = vsel %vm1279, %v1641, %v1614
        %v1643 = vsel %vm1634, %v1642, %v1618
        %v1644 = vsel %vm1284, %v1643, %v1622
        %v1645 = vsel %vm1637, %v1644, %v1626
        %v1646 = vld [vmem:[%s7] sm:$0xff]
        %v1647 = vld [vmem:[%s7 + $0x8] sm:$0xff]
        %v1648 = vld [vmem:[%s7 + $0x10] sm:$0xff]
        %v1649 = vld [vmem:[%s7 + $0x18] sm:$0xff]
        %v1650 = vld [vmem:[%s7 + $0x20] sm:$0xff]
        %v1651 = vld [vmem:[%s7 + $0x28] sm:$0xff]
        %v1652 = vld [vmem:[%s7 + $0x30] sm:$0xff]
        %v1653 = vld [vmem:[%s7 + $0x38] sm:$0xff]
        %v1654 = vld [vmem:[%s7 + $0x40] sm:$0xff]
        %v1655 = vld [vmem:[%s7 + $0x48] sm:$0xff]
        %v1656 = vld [vmem:[%s7 + $0x50] sm:$0xff]
        %v1657 = vld [vmem:[%s7 + $0x58] sm:$0xff]
        %v1658 = vld [vmem:[%s7 + $0x60] sm:$0xff]
        %v1659 = vld [vmem:[%s7 + $0x68] sm:$0xff]
        %v1660 = vld [vmem:[%s7 + $0x70] sm:$0xff]
        %v1661 = vld [vmem:[%s7 + $0x78] sm:$0xff]
        %v1662 = vld [vmem:[%s7 + $0x80] sm:$0xff]
        %v1663 = vld [vmem:[%s7 + $0x88] sm:$0xff]
        %v1664 = vld [vmem:[%s7 + $0x90] sm:$0xff]
        %v1665 = vld [vmem:[%s7 + $0x98] sm:$0xff]
        %v1666 = vld [vmem:[%s7 + $0xa0] sm:$0xff]
        %v1667 = vld [vmem:[%s7 + $0xa8] sm:$0xff]
        %v1668 = vld [vmem:[%s7 + $0xb0] sm:$0xff]
        %v1669 = vld [vmem:[%s7 + $0xb8] sm:$0xff]
        %v1670 = vld [vmem:[%s7 + $0xc0] sm:$0xff]
        %v1671 = vld [vmem:[%s7 + $0xc8] sm:$0xff]
        %v1672 = vld [vmem:[%s7 + $0xd0] sm:$0xff]
        %v1673 = vld [vmem:[%s7 + $0xd8] sm:$0xff]
        %v1674 = vld [vmem:[%s7 + $0xe0] sm:$0xff]
        %v1675 = vld [vmem:[%s7 + $0xe8] sm:$0xff]
        %v1676 = vld [vmem:[%s7 + $0xf0] sm:$0xff]
        %v1677 = vld [vmem:[%s7 + $0xf8] sm:$0xff]
        %v1678 = vld [vmem:[%s8] sm:$0x1]
        %v1680 = vlaneseq
        %v1681 = vshrl.u32 %v1680, 7
        %v1682 = vsub.s32 0, %v1681
        %v1683 = vrot.slane %v1678, %v1682
        %1685 = vmatprep.subr.mxu0 0.0
        %1686 = vmatpush1.msra.mxu0 %v1646
        %1687 = vmatprep.subr.mxu0 0.0
        %1688 = vmatpush1.msra.mxu0 %v1647
        %1689 = vmatprep.subr.mxu0 0.0
        %1690 = vmatpush1.msra.mxu0 %v1648
        %1691 = vmatprep.subr.mxu0 0.0
        %1692 = vmatpush1.msra.mxu0 %v1649
        %1693 = vmatprep.subr.mxu0 0.0
        %1694 = vmatpush1.msra.mxu0 %v1650
        %1695 = vmatprep.subr.mxu0 0.0
        %1696 = vmatpush1.msra.mxu0 %v1651
        %1697 = vmatprep.subr.mxu0 0.0
        %1698 = vmatpush1.msra.mxu0 %v1652
        %1699 = vmatprep.subr.mxu0 0.0
        %1700 = vmatpush1.msra.mxu0 %v1653
        %1701 = vmatprep.subr.mxu0 0.0
        %1702 = vmatpush1.msra.mxu0 %v1654
        %1703 = vmatprep.subr.mxu0 0.0
        %1704 = vmatpush1.msra.mxu0 %v1655
        %1705 = vmatprep.subr.mxu0 0.0
        %1706 = vmatpush1.msra.mxu0 %v1656
        %1707 = vmatprep.subr.mxu0 0.0
        %1708 = vmatpush1.msra.mxu0 %v1657
        %1709 = vmatprep.subr.mxu0 0.0
        %1710 = vmatpush1.msra.mxu0 %v1658
        %1711 = vmatprep.subr.mxu0 0.0
        %1712 = vmatpush1.msra.mxu0 %v1659
        %1713 = vmatprep.subr.mxu0 0.0
        %1714 = vmatpush1.msra.mxu0 %v1660
        %1715 = vmatprep.subr.mxu0 0.0
        %1716 = vmatpush1.msra.mxu0 %v1661
        %1717 = vmatprep.subr.mxu0 0.0
        %1718 = vmatpush1.msra.mxu0 %v1662
        %1719 = vmatprep.subr.mxu0 0.0
        %1720 = vmatpush1.msra.mxu0 %v1663
        %1721 = vmatprep.subr.mxu0 0.0
        %1722 = vmatpush1.msra.mxu0 %v1664
        %1723 = vmatprep.subr.mxu0 0.0
        %1724 = vmatpush1.msra.mxu0 %v1665
        %1725 = vmatprep.subr.mxu0 0.0
        %1726 = vmatpush1.msra.mxu0 %v1666
        %1727 = vmatprep.subr.mxu0 0.0
        %1728 = vmatpush1.msra.mxu0 %v1667
        %1729 = vmatprep.subr.mxu0 0.0
        %1730 = vmatpush1.msra.mxu0 %v1668
        %1731 = vmatprep.subr.mxu0 0.0
        %1732 = vmatpush1.msra.mxu0 %v1669
        %1733 = vmatprep.subr.mxu0 0.0
        %1734 = vmatpush1.msra.mxu0 %v1670
        %1735 = vmatprep.subr.mxu0 0.0
        %1736 = vmatpush1.msra.mxu0 %v1671
        %1737 = vmatprep.subr.mxu0 0.0
        %1738 = vmatpush1.msra.mxu0 %v1672
        %1739 = vmatprep.subr.mxu0 0.0
        %1740 = vmatpush1.msra.mxu0 %v1673
        %1741 = vmatprep.subr.mxu0 0.0
        %1742 = vmatpush1.msra.mxu0 %v1674
        %1743 = vmatprep.subr.mxu0 0.0
        %1744 = vmatpush1.msra.mxu0 %v1675
        %1745 = vmatprep.subr.mxu0 0.0
        %1746 = vmatpush1.msra.mxu0 %v1676
        %1747 = vmatprep.subr.mxu0 0.0
        %1748 = vmatpush1.msra.mxu0 %v1677
        %1749 = vmatprep.mubr.f32.mxu0 %v1645
        %1750 = vmatmul.mubr.f32.gmra.mrb[0].mxu0 %v1638
        %v1751 = vpop.f32.mrb[0].mxu0
        %v1752 = vadd.f32 %v1683, %v1751
        %v1753 = vpop.f32.mrb[0].mxu0
        %1754 = vdwg.mxu0
        %v1755 = vmax.f32 %v1752, 0.0
        %v1756 = vld [vmem:[%s9] sm:$0xff]
        %v1757 = vld [vmem:[%s9 + $0x8] sm:$0xff]
        %v1758 = vld [vmem:[%s9 + $0x10] sm:$0xff]
        %v1759 = vld [vmem:[%s9 + $0x18] sm:$0xff]
        %v1760 = vld [vmem:[%s10] sm:$0x1]
        %v1762 = vlaneseq
        %v1763 = vshrl.u32 %v1762, 7
        %v1764 = vsub.s32 0, %v1763
        %v1765 = vrot.slane %v1760, %v1764
        %v1768 = vsel %vm1010, %v1755, 0
        %1770 = vmatprep.subr.mxu0 0.0
        %1771 = vmatpush1.msra.mxu0 %v1756
        %1772 = vmatprep.subr.mxu0 0.0
        %1773 = vmatpush1.msra.mxu0 %v1757
        %1774 = vmatprep.subr.mxu0 0.0
        %1775 = vmatpush1.msra.mxu0 %v1758
        %1776 = vmatprep.subr.mxu0 0.0
        %1777 = vmatpush1.msra.mxu0 %v1759
        %1778 = vmatprep.subr.mxu0 0.0
        %1779 = vmatpush1.msra.mxu0 0.0
        %1780 = vmatprep.subr.mxu0 0.0
        %1781 = vmatpush1.msra.mxu0 0.0
        %1782 = vmatprep.subr.mxu0 0.0
        %1783 = vmatpush1.msra.mxu0 0.0
        %1784 = vmatprep.subr.mxu0 0.0
        %1785 = vmatpush1.msra.mxu0 0.0
        %1786 = vmatprep.subr.mxu0 0.0
        %1787 = vmatpush1.msra.mxu0 0.0
        %1788 = vmatprep.subr.mxu0 0.0
        %1789 = vmatpush1.msra.mxu0 0.0
        %1790 = vmatprep.subr.mxu0 0.0
        %1791 = vmatpush1.msra.mxu0 0.0
        %1792 = vmatprep.subr.mxu0 0.0
        %1793 = vmatpush1.msra.mxu0 0.0
        %1794 = vmatprep.subr.mxu0 0.0
        %1795 = vmatpush1.msra.mxu0 0.0
        %1796 = vmatprep.subr.mxu0 0.0
        %1797 = vmatpush1.msra.mxu0 0.0
        %1798 = vmatprep.subr.mxu0 0.0
        %1799 = vmatpush1.msra.mxu0 0.0
        %1800 = vmatprep.subr.mxu0 0.0
        %1801 = vmatpush1.msra.mxu0 0.0
        %1802 = vmatprep.subr.mxu0 0.0
        %1803 = vmatpush1.msra.mxu0 0.0
        %1804 = vmatprep.subr.mxu0 0.0
        %1805 = vmatpush1.msra.mxu0 0.0
        %1806 = vmatprep.subr.mxu0 0.0
        %1807 = vmatpush1.msra.mxu0 0.0
        %1808 = vmatprep.subr.mxu0 0.0
        %1809 = vmatpush1.msra.mxu0 0.0
        %1810 = vmatprep.subr.mxu0 0.0
        %1811 = vmatpush1.msra.mxu0 0.0
        %1812 = vmatprep.subr.mxu0 0.0
        %1813 = vmatpush1.msra.mxu0 0.0
        %1814 = vmatprep.subr.mxu0 0.0
        %1815 = vmatpush1.msra.mxu0 0.0
        %1816 = vmatprep.subr.mxu0 0.0
        %1817 = vmatpush1.msra.mxu0 0.0
        %1818 = vmatprep.subr.mxu0 0.0
        %1819 = vmatpush1.msra.mxu0 0.0
        %1820 = vmatprep.subr.mxu0 0.0
        %1821 = vmatpush1.msra.mxu0 0.0
        %1822 = vmatprep.subr.mxu0 0.0
        %1823 = vmatpush1.msra.mxu0 0.0
        %1824 = vmatprep.subr.mxu0 0.0
        %1825 = vmatpush1.msra.mxu0 0.0
        %1826 = vmatprep.subr.mxu0 0.0
        %1827 = vmatpush1.msra.mxu0 0.0
        %1828 = vmatprep.subr.mxu0 0.0
        %1829 = vmatpush1.msra.mxu0 0.0
        %1830 = vmatprep.subr.mxu0 0.0
        %1831 = vmatpush1.msra.mxu0 0.0
        %1832 = vmatprep.subr.mxu0 0.0
        %1833 = vmatpush1.msra.mxu0 0.0
        %1834 = vmatprep.mubr.f32.mxu0 0.0
        %1835 = vmatmul.mubr.f32.gmra.mrb[0].mxu0 %v1768
        %v1836 = vpop.f32.mrb[0].mxu0
        %v1837 = vadd.f32 %v1765, %v1836
        %v1838 = vpop.f32.mrb[0].mxu0
        %1839 = vdwg.mxu0
        %1840 = vst [vmem:[%s11] sm:$0x3] %v1837
      $region68: #{encoder_forward.1} parent=63 // pred_fallthru
        _
      // Predicated region
      $region69: #{encoder_forward.1} parent=63 // pred_check
        %p1841 = pneg %p271
      $region70: #{encoder_forward.1} parent=63 // pred_check_branch
        %1843 = sbr.rel (%p1841) target = $region72
      $region71: #{encoder_forward.1} parent=63 // pred_region
        _
      $region72: #{encoder_forward.1} parent=63 // pred_fallthru
        _
      // Predicated region
      $region73: #{encoder_forward.1} parent=63 // pred_check
        %p1844 = pneg %p271
      $region74: #{encoder_forward.1} parent=63 // pred_check_branch
        %1846 = sbr.rel (%p1844) target = $region76
      $region75: #{encoder_forward.1} parent=63 // pred_region
        _
      $region76: #{encoder_forward.1} parent=63 // pred_fallthru
        _
    $region64: #{encoder_forward.1} parent=5 // pred_fallthru
      _
    %p1847 = scmp.le.s32.totalorder 2, %s17
    // Predicated region
    $region77: #{encoder_forward.1} parent=5 // pred_check
      %p1848 = pneg %p1847
    $region78: #{encoder_forward.1} parent=5 // pred_check_branch
      %1850 = sbr.rel (%p1848) target = $region80
    $region79: #{encoder_forward.1} parent=5 // pred_region
      %s1851 = ssub.s32 %s17, 2
    $region80: #{encoder_forward.1} parent=5 // pred_fallthru
      _
  $region6: #{encoder_forward.1} parent=0 // loop_footer
    %s21 = sadd.s32 1, %s17
  $region7: #{encoder_forward.1} parent=0 // loop_footer_branch
    %16 = sbr.rel target = $region3
  $region8: #{encoder_forward.1} parent=0 // loop_exit
    _

</llo_original>
